<compile_context>
chip_gen: v7x
topology: tpu7x:2x2x1
jax: 0.10.0
libtpu: 0.0.40
codegen_flags: <defaults>
</compile_context>

<pallas_src>
import functools

import jax
import jax.numpy as jnp
from jax import lax
from jax.experimental import pallas as pl
from jax.experimental.pallas import tpu as pltpu


# ----------------------------------------------------------------------------
# Fused SepConv kernel: one batch element per grid step, intermediates in VMEM.
# ----------------------------------------------------------------------------
def _sepconv_kernel(x_ref, dw1_ref, w1_ref, b1_ref, w2_ref, b2_ref, o_ref,
                    xp_scr, hp_scr, *, h, w, cin, mid, cout, ho, wo, k, stride, pad):
    f32 = jnp.float32

    # ---- stage 1: depthwise KxK, stride `stride`; zero padding done in VMEM ----
    xp_scr[...] = jnp.zeros_like(xp_scr)                       # halo zeros
    xp_scr[pad:pad + h, pad:pad + w, :] = x_ref[0].astype(f32)

    if stride == 2:
        hp1, wp1 = h + 2 * pad, w + 2 * pad
        # Pre-split rows/cols into even/odd parity slabs (4 strided loads total);
        # every tap below becomes a cheap contiguous slice.
        r_par = (pl.ds(0, (hp1 + 1) // 2, 2), pl.ds(1, hp1 // 2, 2))
        c_par = (pl.ds(0, (wp1 + 1) // 2, 2), pl.ds(1, wp1 // 2, 2))
        slabs = [[xp_scr[r_par[rp], c_par[cp], :] for cp in range(2)]
                 for rp in range(2)]

        def patch1(kh, kw):
            return slabs[kh % 2][kw % 2][kh // 2:kh // 2 + ho,
                                         kw // 2:kw // 2 + wo, :]
    else:  # stride == 1
        xp = xp_scr[...]

        def patch1(kh, kw):
            return xp[kh:kh + ho, kw:kw + wo, :]

    w_dw1 = dw1_ref[...].astype(f32)                           # (K, K, Cin), hoisted cast
    acc = jnp.zeros((ho, wo, cin), f32)
    for kh in range(k):
        for kw in range(k):
            acc = acc + patch1(kh, kw) * w_dw1[kh, kw]

    # ---- stage 2: 1x1 expand (K = Cin is tiny -> VPU broadcast-FMA) + BN1 + ReLU ----
    w1 = w1_ref[...].astype(f32)                               # (Cin, Mid), BN1 scale folded
    b1 = b1_ref[...].astype(f32)                               # (1, Mid)
    y1 = jnp.broadcast_to(b1.reshape(1, 1, mid), (ho, wo, mid))
    for c in range(cin):                                       # unrolled, K = Cin
        y1 = y1 + acc[:, :, c:c + 1] * w1[c]
    y1 = jnp.maximum(y1, 0.0)

    # ---- stage 3: zero-pad mid activation in VMEM for the second stencil ----
    hp_scr[...] = jnp.zeros_like(hp_scr)
    hp_scr[pad:pad + ho, pad:pad + wo, :] = y1

    # ---- stage 4: depthwise KxK (stride 1) fused with 1x1 project + BN2 via im2col ----
    # X[p, (kh,kw,c)] = hpad[ph+kh, pw+kw, c] ; W2[(kh,kw,c), o] = dw2 * pw2 * bn2_scale
    hp = hp_scr[...]
    cols = [hp[kh:kh + ho, kw:kw + wo, :] for kh in range(k) for kw in range(k)]
    x2 = jnp.concatenate(cols, axis=-1).reshape(ho * wo, k * k * mid)   # (M, 9*Mid)
    y2 = jnp.dot(x2, w2_ref[...].astype(f32), preferred_element_type=f32)
    y2 = jnp.maximum(y2 + b2_ref[...].astype(f32), 0.0)
    o_ref[0] = y2.reshape(ho, wo, cout).astype(o_ref.dtype)


def _sepconv_pallas(x_nhwc, dw1, w1, b1, w2, b2, *, stride, padding):
    n, h, w, cin = x_nhwc.shape
    k = dw1.shape[0]
    mid = w1.shape[1]
    cout = w2.shape[1]
    assert stride in (1, 2), "only stride 1 or 2 supported"
    ho = (h + 2 * padding - k) // stride + 1
    wo = (w + 2 * padding - k) // stride + 1
    hp1, wp1 = h + 2 * padding, w + 2 * padding
    hp2, wp2 = ho + 2 * padding, wo + 2 * padding

    kernel = functools.partial(
        _sepconv_kernel, h=h, w=w, cin=cin, mid=mid, cout=cout,
        ho=ho, wo=wo, k=k, stride=stride, pad=padding)

    return pl.pallas_call(
        kernel,
        out_shape=jax.ShapeDtypeStruct((n, ho, wo, cout), x_nhwc.dtype),
        grid=(n,),
        in_specs=[
            pl.BlockSpec((1, h, w, cin), lambda i: (i, 0, 0, 0)),   # x (one batch elem)
            pl.BlockSpec((k, k, cin), lambda i: (0, 0, 0)),         # depthwise-1 weights
            pl.BlockSpec((cin, mid), lambda i: (0, 0)),             # pw1 * bn1_scale
            pl.BlockSpec((1, mid), lambda i: (0, 0)),               # bn1 bias
            pl.BlockSpec((k * k * mid, cout), lambda i: (0, 0)),    # fused dw2*pw2*bn2_scale
            pl.BlockSpec((1, cout), lambda i: (0, 0)),              # bn2 bias
        ],
        out_specs=pl.BlockSpec((1, ho, wo, cout), lambda i: (i, 0, 0, 0)),
        scratch_shapes=[
            pltpu.VMEM((hp1, wp1, cin), jnp.float32),   # padded input (stage-1 halo)
            pltpu.VMEM((hp2, wp2, mid), jnp.float32),   # padded mid activation (stage-4 halo)
        ],
        compiler_params=pltpu.CompilerParams(dimension_semantics=("parallel",)),
    )(x_nhwc, dw1, w1, b1, w2, b2)


# ----------------------------------------------------------------------------
# Forward wrapper (PyTorch NCHW in / NCHW out). stride & padding are static.
# ----------------------------------------------------------------------------
@functools.partial(jax.jit, static_argnames=("stride", "padding"))
def sepconv_forward(x_nchw, params, *, stride=2, padding=1):
    x = jnp.transpose(x_nchw, (0, 2, 3, 1))                    # NCHW -> NHWC
    y = _sepconv_pallas(x, params["dw1"], params["w1"], params["b1"],
                        params["w2"], params["b2"], stride=stride, padding=padding)
    return jnp.transpose(y, (0, 3, 1, 2))                      # NHWC -> NCHW


# ----------------------------------------------------------------------------
# Parameter construction: PyTorch-shaped raw params + host-side folding.
# ----------------------------------------------------------------------------
def make_sepconv_params(key, channel_in, channel_out, kernel_size, max_channel):
    cardinality = int(max_channel / channel_in) if channel_in <= max_channel else 0.5
    mid = int(channel_in * cardinality)
    eps = 1e-5
    ks = jax.random.split(key, 12)

    raw = dict(
        dw1_t=0.1 * jax.random.normal(ks[0], (channel_in, 1, kernel_size, kernel_size), jnp.float32),
        pw1_t=0.1 * jax.random.normal(ks[1], (mid, channel_in, 1, 1), jnp.float32),
        g1=1.0 + 0.1 * jax.random.normal(ks[2], (mid,), jnp.float32),
        beta1=0.1 * jax.random.normal(ks[3], (mid,), jnp.float32),
        mu1=0.1 * jax.random.normal(ks[4], (mid,), jnp.float32),
        var1=jax.random.uniform(ks[5], (mid,), jnp.float32, minval=0.5, maxval=1.5),
        dw2_t=0.1 * jax.random.normal(ks[6], (mid, 1, kernel_size, kernel_size), jnp.float32),
        pw2_t=0.1 * jax.random.normal(ks[7], (channel_out, mid, 1, 1), jnp.float32),
        g2=1.0 + 0.1 * jax.random.normal(ks[8], (channel_out,), jnp.float32),
        beta2=0.1 * jax.random.normal(ks[9], (channel_out,), jnp.float32),
        mu2=0.1 * jax.random.normal(ks[10], (channel_out,), jnp.float32),
        var2=jax.random.uniform(ks[11], (channel_out,), jnp.float32, minval=0.5, maxval=1.5),
    )

    # Fold BatchNorm (inference) into per-channel scale/bias.
    s1 = raw["g1"] / jnp.sqrt(raw["var1"] + eps)
    b1 = raw["beta1"] - raw["mu1"] * s1
    s2 = raw["g2"] / jnp.sqrt(raw["var2"] + eps)
    b2 = raw["beta2"] - raw["mu2"] * s2

    # Kernel-friendly layouts (one-time, host side).
    dw1 = jnp.transpose(raw["dw1_t"][:, 0], (1, 2, 0))                   # (K, K, Cin)
    w1 = jnp.transpose(raw["pw1_t"][:, :, 0, 0], (1, 0)) * s1[None, :]   # (Cin, Mid) * bn1 scale
    dw2 = jnp.transpose(raw["dw2_t"][:, 0], (1, 2, 0))                   # (K, K, Mid)
    pw2 = jnp.transpose(raw["pw2_t"][:, :, 0, 0], (1, 0))                # (Mid, Cout)
    # Fuse depthwise-2 x pointwise-2 x BN2-scale into one im2col weight (K*K*Mid, Cout).
    w2 = (dw2[:, :, :, None] * pw2[None, None, :, :]).reshape(
        kernel_size * kernel_size * mid, channel_out) * s2[None, :]

    params = dict(dw1=dw1, w1=w1, b1=b1.reshape(1, mid),
                  w2=w2, b2=b2.reshape(1, channel_out))
    return params, raw


# ----------------------------------------------------------------------------
# Pure-XLA reference (same math, PyTorch semantics) for a correctness check.
# ----------------------------------------------------------------------------
def sepconv_reference(x_nchw, raw, *, stride, padding):
    eps = 1e-5
    dn = ("NCHW", "OIHW", "NCHW")

    def bn(y, g, beta, mu, var):
        s = g / jnp.sqrt(var + eps)
        return y * s[None, :, None, None] + (beta - mu * s)[None, :, None, None]

    y = lax.conv_general_dilated(x_nchw, raw["dw1_t"], (stride, stride),
                                 [(padding, padding)] * 2, dimension_numbers=dn,
                                 feature_group_count=x_nchw.shape[1])
    y = lax.conv_general_dilated(y, raw["pw1_t"], (1, 1), [(0, 0)] * 2,
                                 dimension_numbers=dn)
    y = jnp.maximum(bn(y, raw["g1"], raw["beta1"], raw["mu1"], raw["var1"]), 0.0)
    y = lax.conv_general_dilated(y, raw["dw2_t"], (1, 1), [(padding, padding)] * 2,
                                 dimension_numbers=dn, feature_group_count=y.shape[1])
    y = lax.conv_general_dilated(y, raw["pw2_t"], (1, 1), [(0, 0)] * 2,
                                 dimension_numbers=dn)
    y = jnp.maximum(bn(y, raw["g2"], raw["beta2"], raw["mu2"], raw["var2"]), 0.0)
    return y


if __name__ == "__main__":
    # Module-consistent small shapes:
    #   channel_in=4, channel_out=8, kernel_size=3, stride=2, padding=1,
    #   max_channel=32 -> cardinality=8, mid channels=32.
    N, C_IN, H, W = 2, 4, 16, 16
    C_OUT, K, MAXC = 8, 3, 32

    key = jax.random.PRNGKey(0)
    kx, kp = jax.random.split(key)
    x = jax.random.normal(kx, (N, C_IN, H, W), jnp.float32)
    params, raw = make_sepconv_params(kp, C_IN, C_OUT, K, MAXC)

    out = sepconv_forward(x, params, stride=2, padding=1)
    out = jax.block_until_ready(out)
    assert out.shape == (N, C_OUT, H // 2, W // 2), out.shape
    assert bool(jnp.all(jnp.isfinite(out)))

    ref = sepconv_reference(x, raw, stride=2, padding=1)
    err = float(jnp.max(jnp.abs(out - ref)))
    assert err < 5e-3, f"mismatch vs XLA reference: max abs err = {err}"
    print("KERNEL_OK")
</pallas_src>

<mosaic_0001>
module attributes {stable_mosaic.version = 11 : i64} {
  func.func @_sepconv_kernel(%arg0: i32, %arg1: memref<1x16x16x4xf32, #tpu.memory_space<vmem>>, %arg2: memref<3x3x4xf32, #tpu.memory_space<vmem>>, %arg3: memref<4x32xf32, #tpu.memory_space<vmem>>, %arg4: memref<1x32xf32, #tpu.memory_space<vmem>>, %arg5: memref<288x8xf32, #tpu.memory_space<vmem>>, %arg6: memref<1x8xf32, #tpu.memory_space<vmem>>, %arg7: memref<1x8x8x8xf32, #tpu.memory_space<vmem>>, %arg8: memref<18x18x4xf32, #tpu.memory_space<vmem>>, %arg9: memref<10x10x32xf32, #tpu.memory_space<vmem>>) attributes {dimension_semantics = [#tpu.dimension_semantics<parallel>], iteration_bounds = array<i64: 2>, scalar_prefetch = 0 : i64, scratch_operands = 2 : i64, tpu.core_type = #tpu.core_type<tc>, window_params = [{transform_indices = @transform_0, window_bounds = array<i64: 1, 16, 16, 4>}, {pipeline_mode = #tpu.pipeline_mode<synchronous>, transform_indices = @transform_1, window_bounds = array<i64: 3, 3, 4>}, {pipeline_mode = #tpu.pipeline_mode<synchronous>, transform_indices = @transform_2, window_bounds = array<i64: 4, 32>}, {pipeline_mode = #tpu.pipeline_mode<synchronous>, transform_indices = @transform_3, window_bounds = array<i64: 1, 32>}, {pipeline_mode = #tpu.pipeline_mode<synchronous>, transform_indices = @transform_4, window_bounds = array<i64: 288, 8>}, {pipeline_mode = #tpu.pipeline_mode<synchronous>, transform_indices = @transform_5, window_bounds = array<i64: 1, 8>}, {transform_indices = @transform_6, window_bounds = array<i64: 1, 8, 8, 8>}]} {
    %cst = arith.constant 0.000000e+00 : f32
    %0 = vector.broadcast %cst : f32 to vector<18x18x4xf32>
    %c0 = arith.constant 0 : index
    %c0_0 = arith.constant 0 : index
    %c0_1 = arith.constant 0 : index
    %1 = vector.load %arg8[%c0, %c0_0, %c0_1] : memref<18x18x4xf32, #tpu.memory_space<vmem>>, vector<18x18x4xf32>
    tpu.vector_store %arg8[%c0, %c0_0, %c0_1], %0 {strides = array<i32>} : memref<18x18x4xf32, #tpu.memory_space<vmem>>, vector<18x18x4xf32>,
    %c0_2 = arith.constant 0 : index
    %c0_3 = arith.constant 0 : index
    %c0_4 = arith.constant 0 : index
    %c0_5 = arith.constant 0 : index
    %2 = vector.load %arg1[%c0_2, %c0_3, %c0_4, %c0_5] : memref<1x16x16x4xf32, #tpu.memory_space<vmem>>, vector<1x16x16x4xf32>
    %3 = vector.shape_cast %2 : vector<1x16x16x4xf32> to vector<16x16x4xf32>
    %c1 = arith.constant 1 : index
    %c1_6 = arith.constant 1 : index
    %c0_7 = arith.constant 0 : index
    %4 = vector.load %arg8[%c1, %c1_6, %c0_7] : memref<18x18x4xf32, #tpu.memory_space<vmem>>, vector<16x16x4xf32>
    tpu.vector_store %arg8[%c1, %c1_6, %c0_7], %3 {strides = array<i32>} : memref<18x18x4xf32, #tpu.memory_space<vmem>>, vector<16x16x4xf32>,
    %c0_8 = arith.constant 0 : index
    %c0_9 = arith.constant 0 : index
    %c0_10 = arith.constant 0 : index
    %5 = tpu.strided_load %arg8[%c0_8, %c0_9, %c0_10] {strides = array<i32: 2, 2, 1>} : memref<18x18x4xf32, #tpu.memory_space<vmem>>, vector<9x9x4xf32>
    %c0_11 = arith.constant 0 : index
    %c1_12 = arith.constant 1 : index
    %c0_13 = arith.constant 0 : index
    %6 = tpu.strided_load %arg8[%c0_11, %c1_12, %c0_13] {strides = array<i32: 2, 2, 1>} : memref<18x18x4xf32, #tpu.memory_space<vmem>>, vector<9x9x4xf32>
    %c1_14 = arith.constant 1 : index
    %c0_15 = arith.constant 0 : index
    %c0_16 = arith.constant 0 : index
    %7 = tpu.strided_load %arg8[%c1_14, %c0_15, %c0_16] {strides = array<i32: 2, 2, 1>} : memref<18x18x4xf32, #tpu.memory_space<vmem>>, vector<9x9x4xf32>
    %c1_17 = arith.constant 1 : index
    %c1_18 = arith.constant 1 : index
    %c0_19 = arith.constant 0 : index
    %8 = tpu.strided_load %arg8[%c1_17, %c1_18, %c0_19] {strides = array<i32: 2, 2, 1>} : memref<18x18x4xf32, #tpu.memory_space<vmem>>, vector<9x9x4xf32>
    %c0_20 = arith.constant 0 : index
    %c0_21 = arith.constant 0 : index
    %c0_22 = arith.constant 0 : index
    %9 = vector.load %arg2[%c0_20, %c0_21, %c0_22] : memref<3x3x4xf32, #tpu.memory_space<vmem>>, vector<3x3x4xf32>
    %cst_23 = arith.constant 0.000000e+00 : f32
    %10 = vector.broadcast %cst_23 : f32 to vector<8x8x4xf32>
    %11 = vector.extract_strided_slice %5 {offsets = [0, 0, 0], sizes = [8, 8, 4], strides = [1, 1, 1]} : vector<9x9x4xf32> to vector<8x8x4xf32>
    %12 = vector.extract_strided_slice %9 {offsets = [0, 0, 0], sizes = [1, 1, 4], strides = [1, 1, 1]} : vector<3x3x4xf32> to vector<1x1x4xf32>
    %13 = vector.shape_cast %12 : vector<1x1x4xf32> to vector<4xf32>
    %14 = vector.shape_cast %13 : vector<4xf32> to vector<1x1x4xf32>
    %15 = vector.broadcast %14 : vector<1x1x4xf32> to vector<8x8x4xf32>
    %16 = arith.mulf %11, %15 : vector<8x8x4xf32>
    %17 = arith.addf %10, %16 : vector<8x8x4xf32>
    %18 = vector.extract_strided_slice %6 {offsets = [0, 0, 0], sizes = [8, 8, 4], strides = [1, 1, 1]} : vector<9x9x4xf32> to vector<8x8x4xf32>
    %19 = vector.extract_strided_slice %9 {offsets = [0, 1, 0], sizes = [1, 1, 4], strides = [1, 1, 1]} : vector<3x3x4xf32> to vector<1x1x4xf32>
    %20 = vector.shape_cast %19 : vector<1x1x4xf32> to vector<4xf32>
    %21 = vector.shape_cast %20 : vector<4xf32> to vector<1x1x4xf32>
    %22 = vector.broadcast %21 : vector<1x1x4xf32> to vector<8x8x4xf32>
    %23 = arith.mulf %18, %22 : vector<8x8x4xf32>
    %24 = arith.addf %17, %23 : vector<8x8x4xf32>
    %25 = vector.extract_strided_slice %5 {offsets = [0, 1, 0], sizes = [8, 8, 4], strides = [1, 1, 1]} : vector<9x9x4xf32> to vector<8x8x4xf32>
    %26 = vector.extract_strided_slice %9 {offsets = [0, 2, 0], sizes = [1, 1, 4], strides = [1, 1, 1]} : vector<3x3x4xf32> to vector<1x1x4xf32>
    %27 = vector.shape_cast %26 : vector<1x1x4xf32> to vector<4xf32>
    %28 = vector.shape_cast %27 : vector<4xf32> to vector<1x1x4xf32>
    %29 = vector.broadcast %28 : vector<1x1x4xf32> to vector<8x8x4xf32>
    %30 = arith.mulf %25, %29 : vector<8x8x4xf32>
    %31 = arith.addf %24, %30 : vector<8x8x4xf32>
    %32 = vector.extract_strided_slice %7 {offsets = [0, 0, 0], sizes = [8, 8, 4], strides = [1, 1, 1]} : vector<9x9x4xf32> to vector<8x8x4xf32>
    %33 = vector.extract_strided_slice %9 {offsets = [1, 0, 0], sizes = [1, 1, 4], strides = [1, 1, 1]} : vector<3x3x4xf32> to vector<1x1x4xf32>
    %34 = vector.shape_cast %33 : vector<1x1x4xf32> to vector<4xf32>
    %35 = vector.shape_cast %34 : vector<4xf32> to vector<1x1x4xf32>
    %36 = vector.broadcast %35 : vector<1x1x4xf32> to vector<8x8x4xf32>
    %37 = arith.mulf %32, %36 : vector<8x8x4xf32>
    %38 = arith.addf %31, %37 : vector<8x8x4xf32>
    %39 = vector.extract_strided_slice %8 {offsets = [0, 0, 0], sizes = [8, 8, 4], strides = [1, 1, 1]} : vector<9x9x4xf32> to vector<8x8x4xf32>
    %40 = vector.extract_strided_slice %9 {offsets = [1, 1, 0], sizes = [1, 1, 4], strides = [1, 1, 1]} : vector<3x3x4xf32> to vector<1x1x4xf32>
    %41 = vector.shape_cast %40 : vector<1x1x4xf32> to vector<4xf32>
    %42 = vector.shape_cast %41 : vector<4xf32> to vector<1x1x4xf32>
    %43 = vector.broadcast %42 : vector<1x1x4xf32> to vector<8x8x4xf32>
    %44 = arith.mulf %39, %43 : vector<8x8x4xf32>
    %45 = arith.addf %38, %44 : vector<8x8x4xf32>
    %46 = vector.extract_strided_slice %7 {offsets = [0, 1, 0], sizes = [8, 8, 4], strides = [1, 1, 1]} : vector<9x9x4xf32> to vector<8x8x4xf32>
    %47 = vector.extract_strided_slice %9 {offsets = [1, 2, 0], sizes = [1, 1, 4], strides = [1, 1, 1]} : vector<3x3x4xf32> to vector<1x1x4xf32>
    %48 = vector.shape_cast %47 : vector<1x1x4xf32> to vector<4xf32>
    %49 = vector.shape_cast %48 : vector<4xf32> to vector<1x1x4xf32>
    %50 = vector.broadcast %49 : vector<1x1x4xf32> to vector<8x8x4xf32>
    %51 = arith.mulf %46, %50 : vector<8x8x4xf32>
    %52 = arith.addf %45, %51 : vector<8x8x4xf32>
    %53 = vector.extract_strided_slice %5 {offsets = [1, 0, 0], sizes = [8, 8, 4], strides = [1, 1, 1]} : vector<9x9x4xf32> to vector<8x8x4xf32>
    %54 = vector.extract_strided_slice %9 {offsets = [2, 0, 0], sizes = [1, 1, 4], strides = [1, 1, 1]} : vector<3x3x4xf32> to vector<1x1x4xf32>
    %55 = vector.shape_cast %54 : vector<1x1x4xf32> to vector<4xf32>
    %56 = vector.shape_cast %55 : vector<4xf32> to vector<1x1x4xf32>
    %57 = vector.broadcast %56 : vector<1x1x4xf32> to vector<8x8x4xf32>
    %58 = arith.mulf %53, %57 : vector<8x8x4xf32>
    %59 = arith.addf %52, %58 : vector<8x8x4xf32>
    %60 = vector.extract_strided_slice %6 {offsets = [1, 0, 0], sizes = [8, 8, 4], strides = [1, 1, 1]} : vector<9x9x4xf32> to vector<8x8x4xf32>
    %61 = vector.extract_strided_slice %9 {offsets = [2, 1, 0], sizes = [1, 1, 4], strides = [1, 1, 1]} : vector<3x3x4xf32> to vector<1x1x4xf32>
    %62 = vector.shape_cast %61 : vector<1x1x4xf32> to vector<4xf32>
    %63 = vector.shape_cast %62 : vector<4xf32> to vector<1x1x4xf32>
    %64 = vector.broadcast %63 : vector<1x1x4xf32> to vector<8x8x4xf32>
    %65 = arith.mulf %60, %64 : vector<8x8x4xf32>
    %66 = arith.addf %59, %65 : vector<8x8x4xf32>
    %67 = vector.extract_strided_slice %5 {offsets = [1, 1, 0], sizes = [8, 8, 4], strides = [1, 1, 1]} : vector<9x9x4xf32> to vector<8x8x4xf32>
    %68 = vector.extract_strided_slice %9 {offsets = [2, 2, 0], sizes = [1, 1, 4], strides = [1, 1, 1]} : vector<3x3x4xf32> to vector<1x1x4xf32>
    %69 = vector.shape_cast %68 : vector<1x1x4xf32> to vector<4xf32>
    %70 = vector.shape_cast %69 : vector<4xf32> to vector<1x1x4xf32>
    %71 = vector.broadcast %70 : vector<1x1x4xf32> to vector<8x8x4xf32>
    %72 = arith.mulf %67, %71 : vector<8x8x4xf32>
    %73 = arith.addf %66, %72 : vector<8x8x4xf32>
    %c0_24 = arith.constant 0 : index
    %c0_25 = arith.constant 0 : index
    %74 = vector.load %arg3[%c0_24, %c0_25] : memref<4x32xf32, #tpu.memory_space<vmem>>, vector<4x32xf32>
    %c0_26 = arith.constant 0 : index
    %c0_27 = arith.constant 0 : index
    %75 = vector.load %arg4[%c0_26, %c0_27] : memref<1x32xf32, #tpu.memory_space<vmem>>, vector<1x32xf32>
    %76 = vector.shape_cast %75 : vector<1x32xf32> to vector<1x1x32xf32>
    %77 = vector.shape_cast %76 : vector<1x1x32xf32> to vector<1x1x32xf32>
    %78 = vector.broadcast %77 : vector<1x1x32xf32> to vector<8x8x32xf32>
    %79 = vector.extract_strided_slice %73 {offsets = [0, 0, 0], sizes = [8, 8, 1], strides = [1, 1, 1]} : vector<8x8x4xf32> to vector<8x8x1xf32>
    %80 = vector.extract_strided_slice %74 {offsets = [0, 0], sizes = [1, 32], strides = [1, 1]} : vector<4x32xf32> to vector<1x32xf32>
    %81 = vector.shape_cast %80 : vector<1x32xf32> to vector<32xf32>
    %82 = vector.shape_cast %81 : vector<32xf32> to vector<1x1x32xf32>
    %83 = vector.broadcast %79 : vector<8x8x1xf32> to vector<8x8x32xf32>
    %84 = vector.broadcast %82 : vector<1x1x32xf32> to vector<8x8x32xf32>
    %85 = arith.mulf %83, %84 : vector<8x8x32xf32>
    %86 = arith.addf %78, %85 : vector<8x8x32xf32>
    %87 = vector.extract_strided_slice %73 {offsets = [0, 0, 1], sizes = [8, 8, 1], strides = [1, 1, 1]} : vector<8x8x4xf32> to vector<8x8x1xf32>
    %88 = vector.extract_strided_slice %74 {offsets = [1, 0], sizes = [1, 32], strides = [1, 1]} : vector<4x32xf32> to vector<1x32xf32>
    %89 = vector.shape_cast %88 : vector<1x32xf32> to vector<32xf32>
    %90 = vector.shape_cast %89 : vector<32xf32> to vector<1x1x32xf32>
    %91 = vector.broadcast %87 : vector<8x8x1xf32> to vector<8x8x32xf32>
    %92 = vector.broadcast %90 : vector<1x1x32xf32> to vector<8x8x32xf32>
    %93 = arith.mulf %91, %92 : vector<8x8x32xf32>
    %94 = arith.addf %86, %93 : vector<8x8x32xf32>
    %95 = vector.extract_strided_slice %73 {offsets = [0, 0, 2], sizes = [8, 8, 1], strides = [1, 1, 1]} : vector<8x8x4xf32> to vector<8x8x1xf32>
    %96 = vector.extract_strided_slice %74 {offsets = [2, 0], sizes = [1, 32], strides = [1, 1]} : vector<4x32xf32> to vector<1x32xf32>
    %97 = vector.shape_cast %96 : vector<1x32xf32> to vector<32xf32>
    %98 = vector.shape_cast %97 : vector<32xf32> to vector<1x1x32xf32>
    %99 = vector.broadcast %95 : vector<8x8x1xf32> to vector<8x8x32xf32>
    %100 = vector.broadcast %98 : vector<1x1x32xf32> to vector<8x8x32xf32>
    %101 = arith.mulf %99, %100 : vector<8x8x32xf32>
    %102 = arith.addf %94, %101 : vector<8x8x32xf32>
    %103 = vector.extract_strided_slice %73 {offsets = [0, 0, 3], sizes = [8, 8, 1], strides = [1, 1, 1]} : vector<8x8x4xf32> to vector<8x8x1xf32>
    %104 = vector.extract_strided_slice %74 {offsets = [3, 0], sizes = [1, 32], strides = [1, 1]} : vector<4x32xf32> to vector<1x32xf32>
    %105 = vector.shape_cast %104 : vector<1x32xf32> to vector<32xf32>
    %106 = vector.shape_cast %105 : vector<32xf32> to vector<1x1x32xf32>
    %107 = vector.broadcast %103 : vector<8x8x1xf32> to vector<8x8x32xf32>
    %108 = vector.broadcast %106 : vector<1x1x32xf32> to vector<8x8x32xf32>
    %109 = arith.mulf %107, %108 : vector<8x8x32xf32>
    %110 = arith.addf %102, %109 : vector<8x8x32xf32>
    %cst_28 = arith.constant 0.000000e+00 : f32
    %111 = vector.broadcast %cst_28 : f32 to vector<8x8x32xf32>
    %112 = arith.maximumf %110, %111 : vector<8x8x32xf32>
    %cst_29 = arith.constant 0.000000e+00 : f32
    %113 = vector.broadcast %cst_29 : f32 to vector<10x10x32xf32>
    %c0_30 = arith.constant 0 : index
    %c0_31 = arith.constant 0 : index
    %c0_32 = arith.constant 0 : index
    %114 = vector.load %arg9[%c0_30, %c0_31, %c0_32] : memref<10x10x32xf32, #tpu.memory_space<vmem>>, vector<10x10x32xf32>
    tpu.vector_store %arg9[%c0_30, %c0_31, %c0_32], %113 {strides = array<i32>} : memref<10x10x32xf32, #tpu.memory_space<vmem>>, vector<10x10x32xf32>,
    %c1_33 = arith.constant 1 : index
    %c1_34 = arith.constant 1 : index
    %c0_35 = arith.constant 0 : index
    %115 = vector.load %arg9[%c1_33, %c1_34, %c0_35] : memref<10x10x32xf32, #tpu.memory_space<vmem>>, vector<8x8x32xf32>
    tpu.vector_store %arg9[%c1_33, %c1_34, %c0_35], %112 {strides = array<i32>} : memref<10x10x32xf32, #tpu.memory_space<vmem>>, vector<8x8x32xf32>,
    %c0_36 = arith.constant 0 : index
    %c0_37 = arith.constant 0 : index
    %c0_38 = arith.constant 0 : index
    %116 = vector.load %arg9[%c0_36, %c0_37, %c0_38] : memref<10x10x32xf32, #tpu.memory_space<vmem>>, vector<10x10x32xf32>
    %117 = vector.extract_strided_slice %116 {offsets = [0, 0, 0], sizes = [8, 8, 32], strides = [1, 1, 1]} : vector<10x10x32xf32> to vector<8x8x32xf32>
    %118 = vector.extract_strided_slice %116 {offsets = [0, 1, 0], sizes = [8, 8, 32], strides = [1, 1, 1]} : vector<10x10x32xf32> to vector<8x8x32xf32>
    %119 = vector.extract_strided_slice %116 {offsets = [0, 2, 0], sizes = [8, 8, 32], strides = [1, 1, 1]} : vector<10x10x32xf32> to vector<8x8x32xf32>
    %120 = vector.extract_strided_slice %116 {offsets = [1, 0, 0], sizes = [8, 8, 32], strides = [1, 1, 1]} : vector<10x10x32xf32> to vector<8x8x32xf32>
    %121 = vector.extract_strided_slice %116 {offsets = [1, 1, 0], sizes = [8, 8, 32], strides = [1, 1, 1]} : vector<10x10x32xf32> to vector<8x8x32xf32>
    %122 = vector.extract_strided_slice %116 {offsets = [1, 2, 0], sizes = [8, 8, 32], strides = [1, 1, 1]} : vector<10x10x32xf32> to vector<8x8x32xf32>
    %123 = vector.extract_strided_slice %116 {offsets = [2, 0, 0], sizes = [8, 8, 32], strides = [1, 1, 1]} : vector<10x10x32xf32> to vector<8x8x32xf32>
    %124 = vector.extract_strided_slice %116 {offsets = [2, 1, 0], sizes = [8, 8, 32], strides = [1, 1, 1]} : vector<10x10x32xf32> to vector<8x8x32xf32>
    %125 = vector.extract_strided_slice %116 {offsets = [2, 2, 0], sizes = [8, 8, 32], strides = [1, 1, 1]} : vector<10x10x32xf32> to vector<8x8x32xf32>
    %126 = tpu.concatenate %117, %118, %119, %120, %121, %122, %123, %124, %125 in 2 : vector<8x8x32xf32>, vector<8x8x32xf32>, vector<8x8x32xf32>, vector<8x8x32xf32>, vector<8x8x32xf32>, vector<8x8x32xf32>, vector<8x8x32xf32>, vector<8x8x32xf32>, vector<8x8x32xf32> -> vector<8x8x288xf32>
    %127 = vector.shape_cast %126 : vector<8x8x288xf32> to vector<64x288xf32>
    %c0_39 = arith.constant 0 : index
    %c0_40 = arith.constant 0 : index
    %128 = vector.load %arg5[%c0_39, %c0_40] : memref<288x8xf32, #tpu.memory_space<vmem>>, vector<288x8xf32>
    %cst_41 = arith.constant dense<0.000000e+00> : vector<64x8xf32>
    %129 = tpu.matmul %127, %128, %cst_41 {dimension_numbers = #tpu.dot_dimension_numbers<[1], [0], [0], [1], [0, 0, 1, 1], [], []>} : vector<64x288xf32>, vector<288x8xf32>, vector<64x8xf32> -> vector<64x8xf32>
    %c0_42 = arith.constant 0 : index
    %c0_43 = arith.constant 0 : index
    %130 = vector.load %arg6[%c0_42, %c0_43] : memref<1x8xf32, #tpu.memory_space<vmem>>, vector<1x8xf32>
    %131 = vector.broadcast %130 : vector<1x8xf32> to vector<64x8xf32>
    %132 = arith.addf %129, %131 : vector<64x8xf32>
    %cst_44 = arith.constant 0.000000e+00 : f32
    %133 = vector.broadcast %cst_44 : f32 to vector<64x8xf32>
    %134 = arith.maximumf %132, %133 : vector<64x8xf32>
    %135 = vector.shape_cast %134 : vector<64x8xf32> to vector<8x8x8xf32>
    %c0_45 = arith.constant 0 : index
    %c0_46 = arith.constant 0 : index
    %c0_47 = arith.constant 0 : index
    %c0_48 = arith.constant 0 : index
    %136 = vector.load %arg7[%c0_45, %c0_46, %c0_47, %c0_48] : memref<1x8x8x8xf32, #tpu.memory_space<vmem>>, vector<1x8x8x8xf32>
    %137 = vector.shape_cast %136 : vector<1x8x8x8xf32> to vector<8x8x8xf32>
    %138 = vector.shape_cast %135 : vector<8x8x8xf32> to vector<1x8x8x8xf32>
    tpu.vector_store %arg7[%c0_45, %c0_46, %c0_47, %c0_48], %138 {strides = array<i32>} : memref<1x8x8x8xf32, #tpu.memory_space<vmem>>, vector<1x8x8x8xf32>,
    return
  }
  func.func @transform_0(%arg0: i32) -> (i32, i32, i32, i32) {
    %c0_i32 = arith.constant 0 : i32
    %c0_i32_0 = arith.constant 0 : i32
    %c0_i32_1 = arith.constant 0 : i32
    %c0_i32_2 = arith.constant 0 : i32
    return %arg0, %c0_i32, %c0_i32_0, %c0_i32_1 : i32, i32, i32, i32
  }
  func.func @transform_1(%arg0: i32) -> (i32, i32, i32) {
    %c0_i32 = arith.constant 0 : i32
    %c0_i32_0 = arith.constant 0 : i32
    %c0_i32_1 = arith.constant 0 : i32
    %c0_i32_2 = arith.constant 0 : i32
    return %c0_i32, %c0_i32_0, %c0_i32_1 : i32, i32, i32
  }
  func.func @transform_2(%arg0: i32) -> (i32, i32) {
    %c0_i32 = arith.constant 0 : i32
    %c0_i32_0 = arith.constant 0 : i32
    %c0_i32_1 = arith.constant 0 : i32
    return %c0_i32, %c0_i32_0 : i32, i32
  }
  func.func @transform_3(%arg0: i32) -> (i32, i32) {
    %c0_i32 = arith.constant 0 : i32
    %c0_i32_0 = arith.constant 0 : i32
    %c0_i32_1 = arith.constant 0 : i32
    return %c0_i32, %c0_i32_0 : i32, i32
  }
  func.func @transform_4(%arg0: i32) -> (i32, i32) {
    %c0_i32 = arith.constant 0 : i32
    %c0_i32_0 = arith.constant 0 : i32
    %c0_i32_1 = arith.constant 0 : i32
    return %c0_i32, %c0_i32_0 : i32, i32
  }
  func.func @transform_5(%arg0: i32) -> (i32, i32) {
    %c0_i32 = arith.constant 0 : i32
    %c0_i32_0 = arith.constant 0 : i32
    %c0_i32_1 = arith.constant 0 : i32
    return %c0_i32, %c0_i32_0 : i32, i32
  }
  func.func @transform_6(%arg0: i32) -> (i32, i32, i32, i32) {
    %c0_i32 = arith.constant 0 : i32
    %c0_i32_0 = arith.constant 0 : i32
    %c0_i32_1 = arith.constant 0 : i32
    %c0_i32_2 = arith.constant 0 : i32
    return %arg0, %c0_i32, %c0_i32_0, %c0_i32_1 : i32, i32, i32, i32
  }
}

</mosaic_0001>

<llo_original>
// kernel: sepconv_forward.1
$region0: #{sepconv_forward.1}
  #allocation0 [shape = 'u32[]', space=smem, size = 0x4, offset = 0x4, fixed_abs, tag = 'smem constant byte address 0x4 - core index']
  #allocation1 [shape = 'u32[144,128]{1,0:T(1,128)}', space=vmem, size = 0x12000, scoped, tag = 'internal scratch']
  #allocation2 [shape = 'f32[18,18,4]{2,1,0:T(8,128)}', space=vmem, size = 0x36000, scoped, tag = 'scratch operand']
  #allocation3 [shape = 'f32[10,10,32]{2,1,0:T(8,128)}', space=vmem, size = 0x14000, scoped, tag = 'scratch operand']
  %s0 = inlined_call_operand.vmem [shape: f32[2,16,16,4], index: 0, kind: input, shape index: {}]
  %s1 = inlined_call_operand.vmem [shape: f32[3,3,4], index: 1, kind: input, shape index: {}]
  %s2 = inlined_call_operand.vmem [shape: f32[4,32], index: 2, kind: input, shape index: {}]
  %s3 = inlined_call_operand.vmem [shape: f32[1,32], index: 3, kind: input, shape index: {}]
  %s4 = inlined_call_operand.vmem [shape: f32[288,8], index: 4, kind: input, shape index: {}]
  %s5 = inlined_call_operand.vmem [shape: f32[1,8], index: 5, kind: input, shape index: {}]
  %s6 = inlined_call_operand.vmem [shape: f32[2,8,8,8], index: 6, kind: output, shape index: {}]
  %s7 = sld [smem:[#allocation0]]
  $region57: #{sepconv_forward.1} parent=0
    _
  %s9 = ssub.s32 1, %s7
  %s10 = scalar_select 0, %s9, %s7
  loop: start=0, step=1, limit=4
  $region2: #{sepconv_forward.1} parent=0 // loop_pre_header
    _
  $region3: #{sepconv_forward.1} parent=0 // loop_header
    %s12 = sphi 0, %s16
    %p13 = scmp.ge.s32.totalorder %s12, 4
    %s22 = sphi 0, %s24
    %s25 = sphi 0, %s22
    %s26 = sphi 0, %s25
    %s42 = sphi 0, %s26
    %s46 = sphi 0, %s46
    %s48 = sphi 0, %s46
    %s49 = sphi 0, %s48
    %s63 = sphi 0, %s49
    %s67 = sphi 0, %s67
    %s69 = sphi 0, %s67
    %s70 = sphi 0, %s69
    %s84 = sphi 0, %s70
    %s88 = sphi 0, %s88
    %s90 = sphi 0, %s88
    %s91 = sphi 0, %s90
    %s105 = sphi 0, %s91
    %s109 = sphi 0, %s109
    %s111 = sphi 0, %s109
    %s112 = sphi 0, %s111
    %s126 = sphi 0, %s112
    %s130 = sphi 0, %s130
    %s132 = sphi 0, %s130
    %s133 = sphi 0, %s132
    %s147 = sphi 0, %s133
    %s153 = sphi 0, %s155
    %s156 = sphi 0, %s153
    %s157 = sphi 0, %s156
    %s173 = sphi 0, %s157
  $region4: #{sepconv_forward.1} parent=0 // loop_header_branch
    %15 = sbr.rel (%p13) target = $region8
  $region5: #{sepconv_forward.1} parent=0 // loop_body
    %s17 = ssub.s32 %s12, 1
    %s18 = ssub.s32 %s12, 2
    %s19 = sadd.s32 %s12, 1
    %s20 = ssub.s32 %s12, %s19
    %p21 = scmp.eq.s32.totalorder %s20, 0
    %s23 = sadd.s32 %s22, 1
    %s24 = scalar_select %p21, %s22, %s23
    %p27 = pneg %p21
    %p28 = scmp.eq.s32.totalorder %s12, 1
    %p29 = por %p27, %p28
    %p30 = scmp.ne.s32.totalorder %s22, %s25
    %p31 = scmp.eq.s32.totalorder %s12, 0
    %p32 = por %p30, %p31
    %p33 = scmp.ne.s32.totalorder %s22, %s25
    %p34 = scmp.eq.s32.totalorder %s17, 1
    %p35 = por %p33, %p34
    %p36 = scmp.ne.s32.totalorder %s25, %s26
    %p37 = scmp.eq.s32.totalorder %s17, 0
    %p38 = por %p36, %p37
    %p39 = scmp.ne.s32.totalorder %s25, %s26
    %p40 = scmp.eq.s32.totalorder %s18, 1
    %p41 = por %p39, %p40
    %p43 = scmp.ne.s32.totalorder %s26, %s42
    %p44 = scmp.eq.s32.totalorder %s18, 0
    %p45 = por %p43, %p44
    %s47 = sadd.s32 %s46, 1
    %p50 = scmp.eq.s32.totalorder %s12, 1
    %p51 = scmp.ne.s32.totalorder %s46, %s48
    %p52 = scmp.eq.s32.totalorder %s12, 0
    %p53 = por %p51, %p52
    %p54 = scmp.ne.s32.totalorder %s46, %s48
    %p55 = scmp.eq.s32.totalorder %s17, 1
    %p56 = por %p54, %p55
    %p57 = scmp.ne.s32.totalorder %s48, %s49
    %p58 = scmp.eq.s32.totalorder %s17, 0
    %p59 = por %p57, %p58
    %p60 = scmp.ne.s32.totalorder %s48, %s49
    %p61 = scmp.eq.s32.totalorder %s18, 1
    %p62 = por %p60, %p61
    %p64 = scmp.ne.s32.totalorder %s49, %s63
    %p65 = scmp.eq.s32.totalorder %s18, 0
    %p66 = por %p64, %p65
    %s68 = sadd.s32 %s67, 1
    %p71 = scmp.eq.s32.totalorder %s12, 1
    %p72 = scmp.ne.s32.totalorder %s67, %s69
    %p73 = scmp.eq.s32.totalorder %s12, 0
    %p74 = por %p72, %p73
    %p75 = scmp.ne.s32.totalorder %s67, %s69
    %p76 = scmp.eq.s32.totalorder %s17, 1
    %p77 = por %p75, %p76
    %p78 = scmp.ne.s32.totalorder %s69, %s70
    %p79 = scmp.eq.s32.totalorder %s17, 0
    %p80 = por %p78, %p79
    %p81 = scmp.ne.s32.totalorder %s69, %s70
    %p82 = scmp.eq.s32.totalorder %s18, 1
    %p83 = por %p81, %p82
    %p85 = scmp.ne.s32.totalorder %s70, %s84
    %p86 = scmp.eq.s32.totalorder %s18, 0
    %p87 = por %p85, %p86
    %s89 = sadd.s32 %s88, 1
    %p92 = scmp.eq.s32.totalorder %s12, 1
    %p93 = scmp.ne.s32.totalorder %s88, %s90
    %p94 = scmp.eq.s32.totalorder %s12, 0
    %p95 = por %p93, %p94
    %p96 = scmp.ne.s32.totalorder %s88, %s90
    %p97 = scmp.eq.s32.totalorder %s17, 1
    %p98 = por %p96, %p97
    %p99 = scmp.ne.s32.totalorder %s90, %s91
    %p100 = scmp.eq.s32.totalorder %s17, 0
    %p101 = por %p99, %p100
    %p102 = scmp.ne.s32.totalorder %s90, %s91
    %p103 = scmp.eq.s32.totalorder %s18, 1
    %p104 = por %p102, %p103
    %p106 = scmp.ne.s32.totalorder %s91, %s105
    %p107 = scmp.eq.s32.totalorder %s18, 0
    %p108 = por %p106, %p107
    %s110 = sadd.s32 %s109, 1
    %p113 = scmp.eq.s32.totalorder %s12, 1
    %p114 = scmp.ne.s32.totalorder %s109, %s111
    %p115 = scmp.eq.s32.totalorder %s12, 0
    %p116 = por %p114, %p115
    %p117 = scmp.ne.s32.totalorder %s109, %s111
    %p118 = scmp.eq.s32.totalorder %s17, 1
    %p119 = por %p117, %p118
    %p120 = scmp.ne.s32.totalorder %s111, %s112
    %p121 = scmp.eq.s32.totalorder %s17, 0
    %p122 = por %p120, %p121
    %p123 = scmp.ne.s32.totalorder %s111, %s112
    %p124 = scmp.eq.s32.totalorder %s18, 1
    %p125 = por %p123, %p124
    %p127 = scmp.ne.s32.totalorder %s112, %s126
    %p128 = scmp.eq.s32.totalorder %s18, 0
    %p129 = por %p127, %p128
    %s131 = sadd.s32 %s130, 1
    %p134 = scmp.eq.s32.totalorder %s12, 1
    %p135 = scmp.ne.s32.totalorder %s130, %s132
    %p136 = scmp.eq.s32.totalorder %s12, 0
    %p137 = por %p135, %p136
    %p138 = scmp.ne.s32.totalorder %s130, %s132
    %p139 = scmp.eq.s32.totalorder %s17, 1
    %p140 = por %p138, %p139
    %p141 = scmp.ne.s32.totalorder %s132, %s133
    %p142 = scmp.eq.s32.totalorder %s17, 0
    %p143 = por %p141, %p142
    %p144 = scmp.ne.s32.totalorder %s132, %s133
    %p145 = scmp.eq.s32.totalorder %s18, 1
    %p146 = por %p144, %p145
    %p148 = scmp.ne.s32.totalorder %s133, %s147
    %p149 = scmp.eq.s32.totalorder %s18, 0
    %p150 = por %p148, %p149
    %s151 = ssub.s32 %s12, %s19
    %p152 = scmp.eq.s32.totalorder %s151, 0
    %s154 = sadd.s32 %s153, 1
    %s155 = scalar_select %p152, %s153, %s154
    %p158 = pneg %p152
    %p159 = scmp.eq.s32.totalorder %s12, 1
    %p160 = por %p158, %p159
    %p161 = scmp.ne.s32.totalorder %s153, %s156
    %p162 = scmp.eq.s32.totalorder %s12, 0
    %p163 = por %p161, %p162
    %p164 = scmp.ne.s32.totalorder %s153, %s156
    %p165 = scmp.eq.s32.totalorder %s17, 1
    %p166 = por %p164, %p165
    %p167 = scmp.ne.s32.totalorder %s156, %s157
    %p168 = scmp.eq.s32.totalorder %s17, 0
    %p169 = por %p167, %p168
    %p170 = scmp.ne.s32.totalorder %s156, %s157
    %p171 = scmp.eq.s32.totalorder %s18, 1
    %p172 = por %p170, %p171
    %p174 = scmp.ne.s32.totalorder %s157, %s173
    %p175 = scmp.eq.s32.totalorder %s18, 0
    %p176 = por %p174, %p175
    %p177 = scmp.le.s32.totalorder 1, %s12
    %p178 = scmp.lt.s32.totalorder %s12, 3
    %p179 = pnand %p177, %p178
    %p180 = pneg %p179
    // Predicated region
    $region9: #{sepconv_forward.1} parent=5 // pred_check
      _
    $region10: #{sepconv_forward.1} parent=5 // pred_check_branch
      %182 = sbr.rel (%p179) target = $region12
    $region11: #{sepconv_forward.1} parent=5 // pred_region
      %s183 = ssub.s32 %s12, 1
      // Predicated region
      $region13: #{sepconv_forward.1} parent=11 // pred_check
        %p184 = pneg %p59
      $region14: #{sepconv_forward.1} parent=11 // pred_check_branch
        %186 = sbr.rel (%p184) target = $region16
      $region15: #{sepconv_forward.1} parent=11 // pred_region
        _
      $region16: #{sepconv_forward.1} parent=11 // pred_fallthru
        _
      // Predicated region
      $region17: #{sepconv_forward.1} parent=11 // pred_check
        %p187 = pneg %p80
      $region18: #{sepconv_forward.1} parent=11 // pred_check_branch
        %189 = sbr.rel (%p187) target = $region20
      $region19: #{sepconv_forward.1} parent=11 // pred_region
        _
      $region20: #{sepconv_forward.1} parent=11 // pred_fallthru
        _
      // Predicated region
      $region21: #{sepconv_forward.1} parent=11 // pred_check
        %p190 = pneg %p101
      $region22: #{sepconv_forward.1} parent=11 // pred_check_branch
        %192 = sbr.rel (%p190) target = $region24
      $region23: #{sepconv_forward.1} parent=11 // pred_region
        _
      $region24: #{sepconv_forward.1} parent=11 // pred_fallthru
        _
      // Predicated region
      $region25: #{sepconv_forward.1} parent=11 // pred_check
        %p193 = pneg %p122
      $region26: #{sepconv_forward.1} parent=11 // pred_check_branch
        %195 = sbr.rel (%p193) target = $region28
      $region27: #{sepconv_forward.1} parent=11 // pred_region
        _
      $region28: #{sepconv_forward.1} parent=11 // pred_fallthru
        _
      // Predicated region
      $region29: #{sepconv_forward.1} parent=11 // pred_check
        %p196 = pneg %p143
      $region30: #{sepconv_forward.1} parent=11 // pred_check_branch
        %198 = sbr.rel (%p196) target = $region32
      $region31: #{sepconv_forward.1} parent=11 // pred_region
        _
      $region32: #{sepconv_forward.1} parent=11 // pred_fallthru
        _
    $region12: #{sepconv_forward.1} parent=5 // pred_fallthru
      _
    %p199 = scmp.lt.s32.totalorder %s12, 2
    // Predicated region
    $region33: #{sepconv_forward.1} parent=5 // pred_check
      %p200 = pneg %p199
    $region34: #{sepconv_forward.1} parent=5 // pred_check_branch
      %202 = sbr.rel (%p200) target = $region36
    $region35: #{sepconv_forward.1} parent=5 // pred_region
      // Predicated region
      $region37: #{sepconv_forward.1} parent=35 // pred_check
        %p203 = pneg %p32
      $region38: #{sepconv_forward.1} parent=35 // pred_check_branch
        %205 = sbr.rel (%p203) target = $region40
      $region39: #{sepconv_forward.1} parent=35 // pred_region
        %p206 = scmp.lt.s32.totalorder %s12, 1
        %s207 = scalar_select %p206, %s12, 1
        %s208 = smul.addr %s207, 32
        %s209 = smul.addr %s208, 8
        %s210 = scalar_lea.vmem %s0, %s209
      $region40: #{sepconv_forward.1} parent=35 // pred_fallthru
        _
    $region36: #{sepconv_forward.1} parent=5 // pred_fallthru
      _
    %p211 = scmp.le.s32.totalorder 1, %s12
    %p212 = scmp.lt.s32.totalorder %s12, 3
    %p213 = pnand %p211, %p212
    %p214 = pneg %p213
    // Predicated region
    $region41: #{sepconv_forward.1} parent=5 // pred_check
      _
    $region42: #{sepconv_forward.1} parent=5 // pred_check_branch
      %216 = sbr.rel (%p213) target = $region44
    $region43: #{sepconv_forward.1} parent=5 // pred_region
      %s217 = ssub.s32 %s12, 1
      %p218 = scmp.lt.s32.totalorder %s17, 1
      %s219 = scalar_select %p218, %s17, 1
      %s220 = smul.addr %s219, 32
      %s221 = smul.addr %s220, 8
      %s222 = scalar_lea.vmem %s0, %s221
      %p223 = pneg %p38
      %p224 = pneg %p35
      %p225 = pneg %p59
      %p226 = pneg %p56
      %p227 = pneg %p80
      %p228 = pneg %p77
      %p229 = pneg %p101
      %p230 = pneg %p98
      %p231 = pneg %p122
      %p232 = pneg %p119
      %p233 = pneg %p143
      %p234 = pneg %p140
      %p235 = pneg %p169
      %p236 = pneg %p166
      %p237 = scmp.lt.s32.totalorder %s17, 1
      %s238 = scalar_select %p237, %s17, 1
      %s239 = smul.addr %s238, 8
      %s240 = smul.addr %s239, 8
      %s241 = scalar_lea.vmem %s6, %s240
      %p242 = scmp.lt.s32.totalorder %s17, 1
      %s243 = scalar_select %p242, %s17, 1
      %s244 = smul.addr %s243, 32
      %s245 = smul.addr %s244, 8
      %s246 = scalar_lea.vmem %s0, %s245
      %p247 = scmp.lt.s32.totalorder %s17, 1
      %s248 = scalar_select %p247, %s17, 1
      %s249 = smul.addr %s248, 8
      %s250 = smul.addr %s249, 8
      %s251 = scalar_lea.vmem %s6, %s250
      %vm252 = vcmask 31744
      %253 = vst.msk [vmem:[#allocation2] sm:$0xff] %vm252, 0.0
      %254 = vst.msk [vmem:[#allocation2 + $0x8] sm:$0xff] %vm252, 0.0
      %vm255 = vcmask 25600
      %256 = vst.msk [vmem:[#allocation2 + $0x10] sm:$0x3] %vm255, 0.0
      %257 = vst.msk [vmem:[#allocation2 + $0x18] sm:$0xff] %vm252, 0.0
      %258 = vst.msk [vmem:[#allocation2 + $0x20] sm:$0xff] %vm252, 0.0
      %259 = vst.msk [vmem:[#allocation2 + $0x28] sm:$0x3] %vm255, 0.0
      %260 = vst.msk [vmem:[#allocation2 + $0x30] sm:$0xff] %vm252, 0.0
      %261 = vst.msk [vmem:[#allocation2 + $0x38] sm:$0xff] %vm252, 0.0
      %262 = vst.msk [vmem:[#allocation2 + $0x40] sm:$0x3] %vm255, 0.0
      %263 = vst.msk [vmem:[#allocation2 + $0x48] sm:$0xff] %vm252, 0.0
      %264 = vst.msk [vmem:[#allocation2 + $0x50] sm:$0xff] %vm252, 0.0
      %265 = vst.msk [vmem:[#allocation2 + $0x58] sm:$0x3] %vm255, 0.0
      %266 = vst.msk [vmem:[#allocation2 + $0x60] sm:$0xff] %vm252, 0.0
      %267 = vst.msk [vmem:[#allocation2 + $0x68] sm:$0xff] %vm252, 0.0
      %268 = vst.msk [vmem:[#allocation2 + $0x70] sm:$0x3] %vm255, 0.0
      %269 = vst.msk [vmem:[#allocation2 + $0x78] sm:$0xff] %vm252, 0.0
      %270 = vst.msk [vmem:[#allocation2 + $0x80] sm:$0xff] %vm252, 0.0
      %271 = vst.msk [vmem:[#allocation2 + $0x88] sm:$0x3] %vm255, 0.0
      %272 = vst.msk [vmem:[#allocation2 + $0x90] sm:$0xff] %vm252, 0.0
      %273 = vst.msk [vmem:[#allocation2 + $0x98] sm:$0xff] %vm252, 0.0
      %274 = vst.msk [vmem:[#allocation2 + $0xa0] sm:$0x3] %vm255, 0.0
      %275 = vst.msk [vmem:[#allocation2 + $0xa8] sm:$0xff] %vm252, 0.0
      %276 = vst.msk [vmem:[#allocation2 + $0xb0] sm:$0xff] %vm252, 0.0
      %277 = vst.msk [vmem:[#allocation2 + $0xb8] sm:$0x3] %vm255, 0.0
      %278 = vst.msk [vmem:[#allocation2 + $0xc0] sm:$0xff] %vm252, 0.0
      %279 = vst.msk [vmem:[#allocation2 + $0xc8] sm:$0xff] %vm252, 0.0
      %280 = vst.msk [vmem:[#allocation2 + $0xd0] sm:$0x3] %vm255, 0.0
      %281 = vst.msk [vmem:[#allocation2 + $0xd8] sm:$0xff] %vm252, 0.0
      %282 = vst.msk [vmem:[#allocation2 + $0xe0] sm:$0xff] %vm252, 0.0
      %283 = vst.msk [vmem:[#allocation2 + $0xe8] sm:$0x3] %vm255, 0.0
      %284 = vst.msk [vmem:[#allocation2 + $0xf0] sm:$0xff] %vm252, 0.0
      %285 = vst.msk [vmem:[#allocation2 + $0xf8] sm:$0xff] %vm252, 0.0
      %286 = vst.msk [vmem:[#allocation2 + $0x100] sm:$0x3] %vm255, 0.0
      %287 = vst.msk [vmem:[#allocation2 + $0x108] sm:$0xff] %vm252, 0.0
      %288 = vst.msk [vmem:[#allocation2 + $0x110] sm:$0xff] %vm252, 0.0
      %289 = vst.msk [vmem:[#allocation2 + $0x118] sm:$0x3] %vm255, 0.0
      %290 = vst.msk [vmem:[#allocation2 + $0x120] sm:$0xff] %vm252, 0.0
      %291 = vst.msk [vmem:[#allocation2 + $0x128] sm:$0xff] %vm252, 0.0
      %292 = vst.msk [vmem:[#allocation2 + $0x130] sm:$0x3] %vm255, 0.0
      %293 = vst.msk [vmem:[#allocation2 + $0x138] sm:$0xff] %vm252, 0.0
      %294 = vst.msk [vmem:[#allocation2 + $0x140] sm:$0xff] %vm252, 0.0
      %295 = vst.msk [vmem:[#allocation2 + $0x148] sm:$0x3] %vm255, 0.0
      %296 = vst.msk [vmem:[#allocation2 + $0x150] sm:$0xff] %vm252, 0.0
      %297 = vst.msk [vmem:[#allocation2 + $0x158] sm:$0xff] %vm252, 0.0
      %298 = vst.msk [vmem:[#allocation2 + $0x160] sm:$0x3] %vm255, 0.0
      %299 = vst.msk [vmem:[#allocation2 + $0x168] sm:$0xff] %vm252, 0.0
      %300 = vst.msk [vmem:[#allocation2 + $0x170] sm:$0xff] %vm252, 0.0
      %301 = vst.msk [vmem:[#allocation2 + $0x178] sm:$0x3] %vm255, 0.0
      %302 = vst.msk [vmem:[#allocation2 + $0x180] sm:$0xff] %vm252, 0.0
      %303 = vst.msk [vmem:[#allocation2 + $0x188] sm:$0xff] %vm252, 0.0
      %304 = vst.msk [vmem:[#allocation2 + $0x190] sm:$0x3] %vm255, 0.0
      %305 = vst.msk [vmem:[#allocation2 + $0x198] sm:$0xff] %vm252, 0.0
      %306 = vst.msk [vmem:[#allocation2 + $0x1a0] sm:$0xff] %vm252, 0.0
      %307 = vst.msk [vmem:[#allocation2 + $0x1a8] sm:$0x3] %vm255, 0.0
      %v308 = vld [vmem:[%s246] sm:$0xff]
      %v309 = vld [vmem:[%s246 + $0x8] sm:$0xff]
      %v310 = vld [vmem:[%s246 + $0x10] sm:$0xff]
      %v311 = vld [vmem:[%s246 + $0x18] sm:$0xff]
      %v312 = vld [vmem:[%s246 + $0x20] sm:$0xff]
      %v313 = vld [vmem:[%s246 + $0x28] sm:$0xff]
      %v314 = vld [vmem:[%s246 + $0x30] sm:$0xff]
      %v315 = vld [vmem:[%s246 + $0x38] sm:$0xff]
      %v316 = vld [vmem:[%s246 + $0x40] sm:$0xff]
      %v317 = vld [vmem:[%s246 + $0x48] sm:$0xff]
      %v318 = vld [vmem:[%s246 + $0x50] sm:$0xff]
      %v319 = vld [vmem:[%s246 + $0x58] sm:$0xff]
      %v320 = vld [vmem:[%s246 + $0x60] sm:$0xff]
      %v321 = vld [vmem:[%s246 + $0x68] sm:$0xff]
      %v322 = vld [vmem:[%s246 + $0x70] sm:$0xff]
      %v323 = vld [vmem:[%s246 + $0x78] sm:$0xff]
      %v324 = vld [vmem:[%s246 + $0x80] sm:$0xff]
      %v325 = vld [vmem:[%s246 + $0x88] sm:$0xff]
      %v326 = vld [vmem:[%s246 + $0x90] sm:$0xff]
      %v327 = vld [vmem:[%s246 + $0x98] sm:$0xff]
      %v328 = vld [vmem:[%s246 + $0xa0] sm:$0xff]
      %v329 = vld [vmem:[%s246 + $0xa8] sm:$0xff]
      %v330 = vld [vmem:[%s246 + $0xb0] sm:$0xff]
      %v331 = vld [vmem:[%s246 + $0xb8] sm:$0xff]
      %v332 = vld [vmem:[%s246 + $0xc0] sm:$0xff]
      %v333 = vld [vmem:[%s246 + $0xc8] sm:$0xff]
      %v334 = vld [vmem:[%s246 + $0xd0] sm:$0xff]
      %v335 = vld [vmem:[%s246 + $0xd8] sm:$0xff]
      %v336 = vld [vmem:[%s246 + $0xe0] sm:$0xff]
      %v337 = vld [vmem:[%s246 + $0xe8] sm:$0xff]
      %v338 = vld [vmem:[%s246 + $0xf0] sm:$0xff]
      %v339 = vld [vmem:[%s246 + $0xf8] sm:$0xff]
      %s340 = scalar_lea.vmem [#allocation2], 24
      %341 = vst.msk [vmem:[%s340 + $0x1] sm:$0xff] %vm252, %v308
      %342 = vst.msk [vmem:[%s340 + $0x9] sm:$0xff] %vm252, %v309
      %343 = vst.msk [vmem:[%s340 + $0x19] sm:$0xff] %vm252, %v310
      %344 = vst.msk [vmem:[%s340 + $0x21] sm:$0xff] %vm252, %v311
      %345 = vst.msk [vmem:[%s340 + $0x31] sm:$0xff] %vm252, %v312
      %346 = vst.msk [vmem:[%s340 + $0x39] sm:$0xff] %vm252, %v313
      %347 = vst.msk [vmem:[%s340 + $0x49] sm:$0xff] %vm252, %v314
      %348 = vst.msk [vmem:[%s340 + $0x51] sm:$0xff] %vm252, %v315
      %349 = vst.msk [vmem:[%s340 + $0x61] sm:$0xff] %vm252, %v316
      %350 = vst.msk [vmem:[%s340 + $0x69] sm:$0xff] %vm252, %v317
      %351 = vst.msk [vmem:[%s340 + $0x79] sm:$0xff] %vm252, %v318
      %352 = vst.msk [vmem:[%s340 + $0x81] sm:$0xff] %vm252, %v319
      %353 = vst.msk [vmem:[%s340 + $0x91] sm:$0xff] %vm252, %v320
      %354 = vst.msk [vmem:[%s340 + $0x99] sm:$0xff] %vm252, %v321
      %355 = vst.msk [vmem:[%s340 + $0xa9] sm:$0xff] %vm252, %v322
      %356 = vst.msk [vmem:[%s340 + $0xb1] sm:$0xff] %vm252, %v323
      %357 = vst.msk [vmem:[%s340 + $0xc1] sm:$0xff] %vm252, %v324
      %358 = vst.msk [vmem:[%s340 + $0xc9] sm:$0xff] %vm252, %v325
      %359 = vst.msk [vmem:[%s340 + $0xd9] sm:$0xff] %vm252, %v326
      %360 = vst.msk [vmem:[%s340 + $0xe1] sm:$0xff] %vm252, %v327
      %361 = vst.msk [vmem:[%s340 + $0xf1] sm:$0xff] %vm252, %v328
      %362 = vst.msk [vmem:[%s340 + $0xf9] sm:$0xff] %vm252, %v329
      %363 = vst.msk [vmem:[%s340 + $0x109] sm:$0xff] %vm252, %v330
      %364 = vst.msk [vmem:[%s340 + $0x111] sm:$0xff] %vm252, %v331
      %365 = vst.msk [vmem:[%s340 + $0x121] sm:$0xff] %vm252, %v332
      %366 = vst.msk [vmem:[%s340 + $0x129] sm:$0xff] %vm252, %v333
      %367 = vst.msk [vmem:[%s340 + $0x139] sm:$0xff] %vm252, %v334
      %368 = vst.msk [vmem:[%s340 + $0x141] sm:$0xff] %vm252, %v335
      %369 = vst.msk [vmem:[%s340 + $0x151] sm:$0xff] %vm252, %v336
      %370 = vst.msk [vmem:[%s340 + $0x159] sm:$0xff] %vm252, %v337
      %371 = vst.msk [vmem:[%s340 + $0x169] sm:$0xff] %vm252, %v338
      %372 = vst.msk [vmem:[%s340 + $0x171] sm:$0xff] %vm252, %v339
      %v373 = vld [vmem:[#allocation2] ss:$2 sm:$0xff]
      %s374 = scalar_lea.vmem [#allocation2], 16
      %v375 = vld [vmem:[%s374] ss:$2 sm:$0x1]
      %s376 = scalar_lea.vmem [#allocation2], 48
      %v377 = vld [vmem:[%s376] ss:$2 sm:$0xff]
      %s378 = scalar_lea.vmem [#allocation2], 64
      %v379 = vld [vmem:[%s378] ss:$2 sm:$0x1]
      %s380 = scalar_lea.vmem [#allocation2], 96
      %v381 = vld [vmem:[%s380] ss:$2 sm:$0xff]
      %s382 = scalar_lea.vmem [#allocation2], 112
      %v383 = vld [vmem:[%s382] ss:$2 sm:$0x1]
      %s384 = scalar_lea.vmem [#allocation2], 144
      %v385 = vld [vmem:[%s384] ss:$2 sm:$0xff]
      %s386 = scalar_lea.vmem [#allocation2], 160
      %v387 = vld [vmem:[%s386] ss:$2 sm:$0x1]
      %s388 = scalar_lea.vmem [#allocation2], 192
      %v389 = vld [vmem:[%s388] ss:$2 sm:$0xff]
      %s390 = scalar_lea.vmem [#allocation2], 208
      %v391 = vld [vmem:[%s390] ss:$2 sm:$0x1]
      %s392 = scalar_lea.vmem [#allocation2], 240
      %v393 = vld [vmem:[%s392] ss:$2 sm:$0xff]
      %s394 = scalar_lea.vmem [#allocation2], 256
      %v395 = vld [vmem:[%s394] ss:$2 sm:$0x1]
      %s396 = scalar_lea.vmem [#allocation2], 288
      %v397 = vld [vmem:[%s396] ss:$2 sm:$0xff]
      %s398 = scalar_lea.vmem [#allocation2], 304
      %v399 = vld [vmem:[%s398] ss:$2 sm:$0x1]
      %s400 = scalar_lea.vmem [#allocation2], 336
      %v401 = vld [vmem:[%s400] ss:$2 sm:$0xff]
      %s402 = scalar_lea.vmem [#allocation2], 352
      %v403 = vld [vmem:[%s402] ss:$2 sm:$0x1]
      %s404 = scalar_lea.vmem [#allocation2], 384
      %v405 = vld [vmem:[%s404] ss:$2 sm:$0xff]
      %s406 = scalar_lea.vmem [#allocation2], 400
      %v407 = vld [vmem:[%s406] ss:$2 sm:$0x1]
      %s408 = scalar_lea.vmem [#allocation2], 1
      %v409 = vld [vmem:[%s408] ss:$2 sm:$0xff]
      %s410 = scalar_lea.vmem [#allocation2], 49
      %v411 = vld [vmem:[%s410] ss:$2 sm:$0xff]
      %s412 = scalar_lea.vmem [#allocation2], 97
      %v413 = vld [vmem:[%s412] ss:$2 sm:$0xff]
      %s414 = scalar_lea.vmem [#allocation2], 145
      %v415 = vld [vmem:[%s414] ss:$2 sm:$0xff]
      %s416 = scalar_lea.vmem [#allocation2], 193
      %v417 = vld [vmem:[%s416] ss:$2 sm:$0xff]
      %s418 = scalar_lea.vmem [#allocation2], 241
      %v419 = vld [vmem:[%s418] ss:$2 sm:$0xff]
      %s420 = scalar_lea.vmem [#allocation2], 289
      %v421 = vld [vmem:[%s420] ss:$2 sm:$0xff]
      %s422 = scalar_lea.vmem [#allocation2], 337
      %v423 = vld [vmem:[%s422] ss:$2 sm:$0xff]
      %s424 = scalar_lea.vmem [#allocation2], 385
      %v425 = vld [vmem:[%s424] ss:$2 sm:$0xff]
      %v426 = vld [vmem:[%s340] ss:$2 sm:$0xff]
      %s427 = scalar_lea.vmem %s340, 16 [#allocation2]
      %v428 = vld [vmem:[%s427] ss:$2 sm:$0x1]
      %s429 = scalar_lea.vmem %s340, 48 [#allocation2]
      %v430 = vld [vmem:[%s429] ss:$2 sm:$0xff]
      %s431 = scalar_lea.vmem %s340, 64 [#allocation2]
      %v432 = vld [vmem:[%s431] ss:$2 sm:$0x1]
      %s433 = scalar_lea.vmem %s340, 96 [#allocation2]
      %v434 = vld [vmem:[%s433] ss:$2 sm:$0xff]
      %s435 = scalar_lea.vmem %s340, 112 [#allocation2]
      %v436 = vld [vmem:[%s435] ss:$2 sm:$0x1]
      %s437 = scalar_lea.vmem %s340, 144 [#allocation2]
      %v438 = vld [vmem:[%s437] ss:$2 sm:$0xff]
      %s439 = scalar_lea.vmem %s340, 160 [#allocation2]
      %v440 = vld [vmem:[%s439] ss:$2 sm:$0x1]
      %s441 = scalar_lea.vmem %s340, 192 [#allocation2]
      %v442 = vld [vmem:[%s441] ss:$2 sm:$0xff]
      %s443 = scalar_lea.vmem %s340, 208 [#allocation2]
      %v444 = vld [vmem:[%s443] ss:$2 sm:$0x1]
      %s445 = scalar_lea.vmem %s340, 240 [#allocation2]
      %v446 = vld [vmem:[%s445] ss:$2 sm:$0xff]
      %s447 = scalar_lea.vmem %s340, 256 [#allocation2]
      %v448 = vld [vmem:[%s447] ss:$2 sm:$0x1]
      %s449 = scalar_lea.vmem %s340, 288 [#allocation2]
      %v450 = vld [vmem:[%s449] ss:$2 sm:$0xff]
      %s451 = scalar_lea.vmem %s340, 304 [#allocation2]
      %v452 = vld [vmem:[%s451] ss:$2 sm:$0x1]
      %s453 = scalar_lea.vmem %s340, 336 [#allocation2]
      %v454 = vld [vmem:[%s453] ss:$2 sm:$0xff]
      %s455 = scalar_lea.vmem %s340, 352 [#allocation2]
      %v456 = vld [vmem:[%s455] ss:$2 sm:$0x1]
      %s457 = scalar_lea.vmem %s340, 1 [#allocation2]
      %v458 = vld [vmem:[%s457] ss:$2 sm:$0xff]
      %s459 = scalar_lea.vmem %s340, 49 [#allocation2]
      %v460 = vld [vmem:[%s459] ss:$2 sm:$0xff]
      %s461 = scalar_lea.vmem %s340, 97 [#allocation2]
      %v462 = vld [vmem:[%s461] ss:$2 sm:$0xff]
      %s463 = scalar_lea.vmem %s340, 145 [#allocation2]
      %v464 = vld [vmem:[%s463] ss:$2 sm:$0xff]
      %s465 = scalar_lea.vmem %s340, 193 [#allocation2]
      %v466 = vld [vmem:[%s465] ss:$2 sm:$0xff]
      %s467 = scalar_lea.vmem %s340, 241 [#allocation2]
      %v468 = vld [vmem:[%s467] ss:$2 sm:$0xff]
      %s469 = scalar_lea.vmem %s340, 289 [#allocation2]
      %v470 = vld [vmem:[%s469] ss:$2 sm:$0xff]
      %s471 = scalar_lea.vmem %s340, 337 [#allocation2]
      %v472 = vld [vmem:[%s471] ss:$2 sm:$0xff]
      %v473 = vld [vmem:[%s1] sm:$0x7]
      %v474 = vld [vmem:[%s1 + $0x4] sm:$0x7]
      %v475 = vld [vmem:[%s1 + $0x8] sm:$0x7]
      %v476 = vlaneseq
      %v477 = vshrl.u32 %v476, 7
      %v478 = vsub.s32 0, %v477
      %v479 = vrot.slane %v473, %v478
      %v480 = vmul.f32 %v373, %v479
      %v481 = vmul.f32 %v377, %v479
      %v482 = vmul.f32 %v381, %v479
      %v483 = vmul.f32 %v385, %v479
      %v484 = vmul.f32 %v389, %v479
      %v485 = vmul.f32 %v393, %v479
      %v486 = vmul.f32 %v397, %v479
      %v487 = vmul.f32 %v401, %v479
      %v488 = vadd.f32 %v480, 0.0
      %v489 = vadd.f32 %v481, 0.0
      %v490 = vadd.f32 %v482, 0.0
      %v491 = vadd.f32 %v483, 0.0
      %v492 = vadd.f32 %v484, 0.0
      %v493 = vadd.f32 %v485, 0.0
      %v494 = vadd.f32 %v486, 0.0
      %v495 = vadd.f32 %v487, 0.0
      %v496 = vlaneseq
      %v497 = vshrl.u32 %v496, 7
      %v498 = vsub.s32 1, %v497
      %v499 = vrot.slane %v473, %v498
      %v500 = vmul.f32 %v409, %v499
      %v501 = vmul.f32 %v411, %v499
      %v502 = vmul.f32 %v413, %v499
      %v503 = vmul.f32 %v415, %v499
      %v504 = vmul.f32 %v417, %v499
      %v505 = vmul.f32 %v419, %v499
      %v506 = vmul.f32 %v421, %v499
      %v507 = vmul.f32 %v423, %v499
      %v508 = vadd.f32 %v488, %v500
      %v509 = vadd.f32 %v489, %v501
      %v510 = vadd.f32 %v490, %v502
      %v511 = vadd.f32 %v491, %v503
      %v512 = vadd.f32 %v492, %v504
      %v513 = vadd.f32 %v493, %v505
      %v514 = vadd.f32 %v494, %v506
      %v515 = vadd.f32 %v495, %v507
      %v516 = vlaneseq
      %v517 = vshrl.u32 %v516, 7
      %v518 = vsub.s32 2, %v517
      %v519 = vrot.slane %v473, %v518
      %v520 = vmul.f32 %v373, %v519
      %v521 = vmul.f32 %v375, %v519
      %v522 = vmul.f32 %v377, %v519
      %v523 = vmul.f32 %v379, %v519
      %v524 = vmul.f32 %v381, %v519
      %v525 = vmul.f32 %v383, %v519
      %v526 = vmul.f32 %v385, %v519
      %v527 = vmul.f32 %v387, %v519
      %v528 = vmul.f32 %v389, %v519
      %v529 = vmul.f32 %v391, %v519
      %v530 = vmul.f32 %v393, %v519
      %v531 = vmul.f32 %v395, %v519
      %v532 = vmul.f32 %v397, %v519
      %v533 = vmul.f32 %v399, %v519
      %v534 = vmul.f32 %v401, %v519
      %v535 = vmul.f32 %v403, %v519
      %vm552 = vcmask 1046528
      %v553 = vrot.slane %v520, 1
      %v554 = vrot.slane %v521, 1
      %v555 = vsel %vm552, %v553, %v554
      %v556 = vrot.slane %v522, 1
      %v557 = vrot.slane %v523, 1
      %v558 = vsel %vm552, %v556, %v557
      %v559 = vrot.slane %v524, 1
      %v560 = vrot.slane %v525, 1
      %v561 = vsel %vm552, %v559, %v560
      %v562 = vrot.slane %v526, 1
      %v563 = vrot.slane %v527, 1
      %v564 = vsel %vm552, %v562, %v563
      %v565 = vrot.slane %v528, 1
      %v566 = vrot.slane %v529, 1
      %v567 = vsel %vm552, %v565, %v566
      %v568 = vrot.slane %v530, 1
      %v569 = vrot.slane %v531, 1
      %v570 = vsel %vm552, %v568, %v569
      %v571 = vrot.slane %v532, 1
      %v572 = vrot.slane %v533, 1
      %v573 = vsel %vm552, %v571, %v572
      %v574 = vrot.slane %v534, 1
      %v575 = vrot.slane %v535, 1
      %v576 = vsel %vm552, %v574, %v575
      %v585 = vadd.f32 %v508, %v555
      %v586 = vadd.f32 %v509, %v558
      %v587 = vadd.f32 %v510, %v561
      %v588 = vadd.f32 %v511, %v564
      %v589 = vadd.f32 %v512, %v567
      %v590 = vadd.f32 %v513, %v570
      %v591 = vadd.f32 %v514, %v573
      %v592 = vadd.f32 %v515, %v576
      %v593 = vlaneseq
      %v594 = vshrl.u32 %v593, 7
      %v595 = vsub.s32 0, %v594
      %v596 = vrot.slane %v474, %v595
      %v597 = vmul.f32 %v426, %v596
      %v598 = vmul.f32 %v430, %v596
      %v599 = vmul.f32 %v434, %v596
      %v600 = vmul.f32 %v438, %v596
      %v601 = vmul.f32 %v442, %v596
      %v602 = vmul.f32 %v446, %v596
      %v603 = vmul.f32 %v450, %v596
      %v604 = vmul.f32 %v454, %v596
      %v605 = vadd.f32 %v585, %v597
      %v606 = vadd.f32 %v586, %v598
      %v607 = vadd.f32 %v587, %v599
      %v608 = vadd.f32 %v588, %v600
      %v609 = vadd.f32 %v589, %v601
      %v610 = vadd.f32 %v590, %v602
      %v611 = vadd.f32 %v591, %v603
      %v612 = vadd.f32 %v592, %v604
      %v613 = vlaneseq
      %v614 = vshrl.u32 %v613, 7
      %v615 = vsub.s32 1, %v614
      %v616 = vrot.slane %v474, %v615
      %v617 = vmul.f32 %v458, %v616
      %v618 = vmul.f32 %v460, %v616
      %v619 = vmul.f32 %v462, %v616
      %v620 = vmul.f32 %v464, %v616
      %v621 = vmul.f32 %v466, %v616
      %v622 = vmul.f32 %v468, %v616
      %v623 = vmul.f32 %v470, %v616
      %v624 = vmul.f32 %v472, %v616
      %v625 = vadd.f32 %v605, %v617
      %v626 = vadd.f32 %v606, %v618
      %v627 = vadd.f32 %v607, %v619
      %v628 = vadd.f32 %v608, %v620
      %v629 = vadd.f32 %v609, %v621
      %v630 = vadd.f32 %v610, %v622
      %v631 = vadd.f32 %v611, %v623
      %v632 = vadd.f32 %v612, %v624
      %v633 = vlaneseq
      %v634 = vshrl.u32 %v633, 7
      %v635 = vsub.s32 2, %v634
      %v636 = vrot.slane %v474, %v635
      %v637 = vmul.f32 %v426, %v636
      %v638 = vmul.f32 %v428, %v636
      %v639 = vmul.f32 %v430, %v636
      %v640 = vmul.f32 %v432, %v636
      %v641 = vmul.f32 %v434, %v636
      %v642 = vmul.f32 %v436, %v636
      %v643 = vmul.f32 %v438, %v636
      %v644 = vmul.f32 %v440, %v636
      %v645 = vmul.f32 %v442, %v636
      %v646 = vmul.f32 %v444, %v636
      %v647 = vmul.f32 %v446, %v636
      %v648 = vmul.f32 %v448, %v636
      %v649 = vmul.f32 %v450, %v636
      %v650 = vmul.f32 %v452, %v636
      %v651 = vmul.f32 %v454, %v636
      %v652 = vmul.f32 %v456, %v636
      %v669 = vrot.slane %v637, 1
      %v670 = vrot.slane %v638, 1
      %v671 = vsel %vm552, %v669, %v670
      %v672 = vrot.slane %v639, 1
      %v673 = vrot.slane %v640, 1
      %v674 = vsel %vm552, %v672, %v673
      %v675 = vrot.slane %v641, 1
      %v676 = vrot.slane %v642, 1
      %v677 = vsel %vm552, %v675, %v676
      %v678 = vrot.slane %v643, 1
      %v679 = vrot.slane %v644, 1
      %v680 = vsel %vm552, %v678, %v679
      %v681 = vrot.slane %v645, 1
      %v682 = vrot.slane %v646, 1
      %v683 = vsel %vm552, %v681, %v682
      %v684 = vrot.slane %v647, 1
      %v685 = vrot.slane %v648, 1
      %v686 = vsel %vm552, %v684, %v685
      %v687 = vrot.slane %v649, 1
      %v688 = vrot.slane %v650, 1
      %v689 = vsel %vm552, %v687, %v688
      %v690 = vrot.slane %v651, 1
      %v691 = vrot.slane %v652, 1
      %v692 = vsel %vm552, %v690, %v691
      %v701 = vadd.f32 %v625, %v671
      %v702 = vadd.f32 %v626, %v674
      %v703 = vadd.f32 %v627, %v677
      %v704 = vadd.f32 %v628, %v680
      %v705 = vadd.f32 %v629, %v683
      %v706 = vadd.f32 %v630, %v686
      %v707 = vadd.f32 %v631, %v689
      %v708 = vadd.f32 %v632, %v692
      %v709 = vlaneseq
      %v710 = vshrl.u32 %v709, 7
      %v711 = vsub.s32 0, %v710
      %v712 = vrot.slane %v475, %v711
      %v713 = vmul.f32 %v377, %v712
      %v714 = vmul.f32 %v381, %v712
      %v715 = vmul.f32 %v385, %v712
      %v716 = vmul.f32 %v389, %v712
      %v717 = vmul.f32 %v393, %v712
      %v718 = vmul.f32 %v397, %v712
      %v719 = vmul.f32 %v401, %v712
      %v720 = vmul.f32 %v405, %v712
      %v721 = vadd.f32 %v701, %v713
      %v722 = vadd.f32 %v702, %v714
      %v723 = vadd.f32 %v703, %v715
      %v724 = vadd.f32 %v704, %v716
      %v725 = vadd.f32 %v705, %v717
      %v726 = vadd.f32 %v706, %v718
      %v727 = vadd.f32 %v707, %v719
      %v728 = vadd.f32 %v708, %v720
      %v729 = vlaneseq
      %v730 = vshrl.u32 %v729, 7
      %v731 = vsub.s32 1, %v730
      %v732 = vrot.slane %v475, %v731
      %v733 = vmul.f32 %v411, %v732
      %v734 = vmul.f32 %v413, %v732
      %v735 = vmul.f32 %v415, %v732
      %v736 = vmul.f32 %v417, %v732
      %v737 = vmul.f32 %v419, %v732
      %v738 = vmul.f32 %v421, %v732
      %v739 = vmul.f32 %v423, %v732
      %v740 = vmul.f32 %v425, %v732
      %v741 = vadd.f32 %v721, %v733
      %v742 = vadd.f32 %v722, %v734
      %v743 = vadd.f32 %v723, %v735
      %v744 = vadd.f32 %v724, %v736
      %v745 = vadd.f32 %v725, %v737
      %v746 = vadd.f32 %v726, %v738
      %v747 = vadd.f32 %v727, %v739
      %v748 = vadd.f32 %v728, %v740
      %v749 = vlaneseq
      %v750 = vshrl.u32 %v749, 7
      %v751 = vsub.s32 2, %v750
      %v752 = vrot.slane %v475, %v751
      %v753 = vmul.f32 %v377, %v752
      %v754 = vmul.f32 %v379, %v752
      %v755 = vmul.f32 %v381, %v752
      %v756 = vmul.f32 %v383, %v752
      %v757 = vmul.f32 %v385, %v752
      %v758 = vmul.f32 %v387, %v752
      %v759 = vmul.f32 %v389, %v752
      %v760 = vmul.f32 %v391, %v752
      %v761 = vmul.f32 %v393, %v752
      %v762 = vmul.f32 %v395, %v752
      %v763 = vmul.f32 %v397, %v752
      %v764 = vmul.f32 %v399, %v752
      %v765 = vmul.f32 %v401, %v752
      %v766 = vmul.f32 %v403, %v752
      %v767 = vmul.f32 %v405, %v752
      %v768 = vmul.f32 %v407, %v752
      %v785 = vrot.slane %v753, 1
      %v786 = vrot.slane %v754, 1
      %v787 = vsel %vm552, %v785, %v786
      %v788 = vrot.slane %v755, 1
      %v789 = vrot.slane %v756, 1
      %v790 = vsel %vm552, %v788, %v789
      %v791 = vrot.slane %v757, 1
      %v792 = vrot.slane %v758, 1
      %v793 = vsel %vm552, %v791, %v792
      %v794 = vrot.slane %v759, 1
      %v795 = vrot.slane %v760, 1
      %v796 = vsel %vm552, %v794, %v795
      %v797 = vrot.slane %v761, 1
      %v798 = vrot.slane %v762, 1
      %v799 = vsel %vm552, %v797, %v798
      %v800 = vrot.slane %v763, 1
      %v801 = vrot.slane %v764, 1
      %v802 = vsel %vm552, %v800, %v801
      %v803 = vrot.slane %v765, 1
      %v804 = vrot.slane %v766, 1
      %v805 = vsel %vm552, %v803, %v804
      %v806 = vrot.slane %v767, 1
      %v807 = vrot.slane %v768, 1
      %v808 = vsel %vm552, %v806, %v807
      %v817 = vadd.f32 %v741, %v787
      %v818 = vadd.f32 %v742, %v790
      %v819 = vadd.f32 %v743, %v793
      %v820 = vadd.f32 %v744, %v796
      %v821 = vadd.f32 %v745, %v799
      %v822 = vadd.f32 %v746, %v802
      %v823 = vadd.f32 %v747, %v805
      %v824 = vadd.f32 %v748, %v808
      %v825 = vld [vmem:[%s2] sm:$0xf]
      %v826 = vld [vmem:[%s3] sm:$0x1]
      %v828 = vlaneseq
      %v829 = vshrl.u32 %v828, 7
      %v830 = vsub.s32 0, %v829
      %v831 = vrot.slane %v826, %v830
      %834 = vset.pattern.permute.xlu0 0
      %835 = vperm.xlu0 %834, %v817
      %v836 = vpop.permute.xlu0 %835
      %839 = vset.pattern.permute.xlu0 0
      %840 = vperm.xlu0 %839, %v818
      %v841 = vpop.permute.xlu0 %840
      %844 = vset.pattern.permute.xlu0 0
      %845 = vperm.xlu0 %844, %v819
      %v846 = vpop.permute.xlu0 %845
      %849 = vset.pattern.permute.xlu0 0
      %850 = vperm.xlu0 %849, %v820
      %v851 = vpop.permute.xlu0 %850
      %854 = vset.pattern.permute.xlu0 0
      %855 = vperm.xlu0 %854, %v821
      %v856 = vpop.permute.xlu0 %855
      %859 = vset.pattern.permute.xlu0 0
      %860 = vperm.xlu0 %859, %v822
      %v861 = vpop.permute.xlu0 %860
      %864 = vset.pattern.permute.xlu0 0
      %865 = vperm.xlu0 %864, %v823
      %v866 = vpop.permute.xlu0 %865
      %869 = vset.pattern.permute.xlu0 0
      %870 = vperm.xlu0 %869, %v824
      %v871 = vpop.permute.xlu0 %870
      %v873 = vlaneseq
      %v874 = vshrl.u32 %v873, 7
      %v875 = vsub.s32 0, %v874
      %v876 = vrot.slane %v825, %v875
      %v877 = vmul.f32 %v836, %v876
      %v878 = vmul.f32 %v841, %v876
      %v879 = vmul.f32 %v846, %v876
      %v880 = vmul.f32 %v851, %v876
      %v881 = vmul.f32 %v856, %v876
      %v882 = vmul.f32 %v861, %v876
      %v883 = vmul.f32 %v866, %v876
      %v884 = vmul.f32 %v871, %v876
      %v885 = vadd.f32 %v831, %v877
      %v886 = vadd.f32 %v831, %v878
      %v887 = vadd.f32 %v831, %v879
      %v888 = vadd.f32 %v831, %v880
      %v889 = vadd.f32 %v831, %v881
      %v890 = vadd.f32 %v831, %v882
      %v891 = vadd.f32 %v831, %v883
      %v892 = vadd.f32 %v831, %v884
      %893 = vset.pattern.permute.xlu0 1
      %894 = vperm.xlu0 %893, %v817
      %v895 = vpop.permute.xlu0 %894
      %897 = vset.pattern.permute.xlu0 1
      %898 = vperm.xlu0 %897, %v818
      %v899 = vpop.permute.xlu0 %898
      %901 = vset.pattern.permute.xlu0 1
      %902 = vperm.xlu0 %901, %v819
      %v903 = vpop.permute.xlu0 %902
      %905 = vset.pattern.permute.xlu0 1
      %906 = vperm.xlu0 %905, %v820
      %v907 = vpop.permute.xlu0 %906
      %909 = vset.pattern.permute.xlu0 1
      %910 = vperm.xlu0 %909, %v821
      %v911 = vpop.permute.xlu0 %910
      %913 = vset.pattern.permute.xlu0 1
      %914 = vperm.xlu0 %913, %v822
      %v915 = vpop.permute.xlu0 %914
      %917 = vset.pattern.permute.xlu0 1
      %918 = vperm.xlu0 %917, %v823
      %v919 = vpop.permute.xlu0 %918
      %921 = vset.pattern.permute.xlu0 1
      %922 = vperm.xlu0 %921, %v824
      %v923 = vpop.permute.xlu0 %922
      %v925 = vlaneseq
      %v926 = vshrl.u32 %v925, 7
      %v927 = vsub.s32 1, %v926
      %v928 = vrot.slane %v825, %v927
      %v929 = vmul.f32 %v895, %v928
      %v930 = vmul.f32 %v899, %v928
      %v931 = vmul.f32 %v903, %v928
      %v932 = vmul.f32 %v907, %v928
      %v933 = vmul.f32 %v911, %v928
      %v934 = vmul.f32 %v915, %v928
      %v935 = vmul.f32 %v919, %v928
      %v936 = vmul.f32 %v923, %v928
      %v937 = vadd.f32 %v885, %v929
      %v938 = vadd.f32 %v886, %v930
      %v939 = vadd.f32 %v887, %v931
      %v940 = vadd.f32 %v888, %v932
      %v941 = vadd.f32 %v889, %v933
      %v942 = vadd.f32 %v890, %v934
      %v943 = vadd.f32 %v891, %v935
      %v944 = vadd.f32 %v892, %v936
      %945 = vset.pattern.permute.xlu0 2
      %946 = vperm.xlu0 %945, %v817
      %v947 = vpop.permute.xlu0 %946
      %949 = vset.pattern.permute.xlu0 2
      %950 = vperm.xlu0 %949, %v818
      %v951 = vpop.permute.xlu0 %950
      %953 = vset.pattern.permute.xlu0 2
      %954 = vperm.xlu0 %953, %v819
      %v955 = vpop.permute.xlu0 %954
      %957 = vset.pattern.permute.xlu0 2
      %958 = vperm.xlu0 %957, %v820
      %v959 = vpop.permute.xlu0 %958
      %961 = vset.pattern.permute.xlu0 2
      %962 = vperm.xlu0 %961, %v821
      %v963 = vpop.permute.xlu0 %962
      %965 = vset.pattern.permute.xlu0 2
      %966 = vperm.xlu0 %965, %v822
      %v967 = vpop.permute.xlu0 %966
      %969 = vset.pattern.permute.xlu0 2
      %970 = vperm.xlu0 %969, %v823
      %v971 = vpop.permute.xlu0 %970
      %973 = vset.pattern.permute.xlu0 2
      %974 = vperm.xlu0 %973, %v824
      %v975 = vpop.permute.xlu0 %974
      %v977 = vlaneseq
      %v978 = vshrl.u32 %v977, 7
      %v979 = vsub.s32 2, %v978
      %v980 = vrot.slane %v825, %v979
      %v981 = vmul.f32 %v947, %v980
      %v982 = vmul.f32 %v951, %v980
      %v983 = vmul.f32 %v955, %v980
      %v984 = vmul.f32 %v959, %v980
      %v985 = vmul.f32 %v963, %v980
      %v986 = vmul.f32 %v967, %v980
      %v987 = vmul.f32 %v971, %v980
      %v988 = vmul.f32 %v975, %v980
      %v989 = vadd.f32 %v937, %v981
      %v990 = vadd.f32 %v938, %v982
      %v991 = vadd.f32 %v939, %v983
      %v992 = vadd.f32 %v940, %v984
      %v993 = vadd.f32 %v941, %v985
      %v994 = vadd.f32 %v942, %v986
      %v995 = vadd.f32 %v943, %v987
      %v996 = vadd.f32 %v944, %v988
      %997 = vset.pattern.permute.xlu0 3
      %998 = vperm.xlu0 %997, %v817
      %v999 = vpop.permute.xlu0 %998
      %1001 = vset.pattern.permute.xlu0 3
      %1002 = vperm.xlu0 %1001, %v818
      %v1003 = vpop.permute.xlu0 %1002
      %1005 = vset.pattern.permute.xlu0 3
      %1006 = vperm.xlu0 %1005, %v819
      %v1007 = vpop.permute.xlu0 %1006
      %1009 = vset.pattern.permute.xlu0 3
      %1010 = vperm.xlu0 %1009, %v820
      %v1011 = vpop.permute.xlu0 %1010
      %1013 = vset.pattern.permute.xlu0 3
      %1014 = vperm.xlu0 %1013, %v821
      %v1015 = vpop.permute.xlu0 %1014
      %1017 = vset.pattern.permute.xlu0 3
      %1018 = vperm.xlu0 %1017, %v822
      %v1019 = vpop.permute.xlu0 %1018
      %1021 = vset.pattern.permute.xlu0 3
      %1022 = vperm.xlu0 %1021, %v823
      %v1023 = vpop.permute.xlu0 %1022
      %1025 = vset.pattern.permute.xlu0 3
      %1026 = vperm.xlu0 %1025, %v824
      %v1027 = vpop.permute.xlu0 %1026
      %v1029 = vlaneseq
      %v1030 = vshrl.u32 %v1029, 7
      %v1031 = vsub.s32 3, %v1030
      %v1032 = vrot.slane %v825, %v1031
      %v1033 = vmul.f32 %v999, %v1032
      %v1034 = vmul.f32 %v1003, %v1032
      %v1035 = vmul.f32 %v1007, %v1032
      %v1036 = vmul.f32 %v1011, %v1032
      %v1037 = vmul.f32 %v1015, %v1032
      %v1038 = vmul.f32 %v1019, %v1032
      %v1039 = vmul.f32 %v1023, %v1032
      %v1040 = vmul.f32 %v1027, %v1032
      %v1041 = vadd.f32 %v989, %v1033
      %v1042 = vadd.f32 %v990, %v1034
      %v1043 = vadd.f32 %v991, %v1035
      %v1044 = vadd.f32 %v992, %v1036
      %v1045 = vadd.f32 %v993, %v1037
      %v1046 = vadd.f32 %v994, %v1038
      %v1047 = vadd.f32 %v995, %v1039
      %v1048 = vadd.f32 %v996, %v1040
      %v1049 = vmax.f32 %v1041, 0.0
      %v1050 = vmax.f32 %v1042, 0.0
      %v1051 = vmax.f32 %v1043, 0.0
      %v1052 = vmax.f32 %v1044, 0.0
      %v1053 = vmax.f32 %v1045, 0.0
      %v1054 = vmax.f32 %v1046, 0.0
      %v1055 = vmax.f32 %v1047, 0.0
      %v1056 = vmax.f32 %v1048, 0.0
      %vm1057 = vcmask 261120
      %1058 = vst.msk [vmem:[#allocation3] sm:$0xff] %vm1057, 0.0
      %vm1059 = vcmask 254976
      %1060 = vst.msk [vmem:[#allocation3 + $0x8] sm:$0x3] %vm1059, 0.0
      %1061 = vst.msk [vmem:[#allocation3 + $0x10] sm:$0xff] %vm1057, 0.0
      %1062 = vst.msk [vmem:[#allocation3 + $0x18] sm:$0x3] %vm1059, 0.0
      %1063 = vst.msk [vmem:[#allocation3 + $0x20] sm:$0xff] %vm1057, 0.0
      %1064 = vst.msk [vmem:[#allocation3 + $0x28] sm:$0x3] %vm1059, 0.0
      %1065 = vst.msk [vmem:[#allocation3 + $0x30] sm:$0xff] %vm1057, 0.0
      %1066 = vst.msk [vmem:[#allocation3 + $0x38] sm:$0x3] %vm1059, 0.0
      %1067 = vst.msk [vmem:[#allocation3 + $0x40] sm:$0xff] %vm1057, 0.0
      %1068 = vst.msk [vmem:[#allocation3 + $0x48] sm:$0x3] %vm1059, 0.0
      %1069 = vst.msk [vmem:[#allocation3 + $0x50] sm:$0xff] %vm1057, 0.0
      %1070 = vst.msk [vmem:[#allocation3 + $0x58] sm:$0x3] %vm1059, 0.0
      %1071 = vst.msk [vmem:[#allocation3 + $0x60] sm:$0xff] %vm1057, 0.0
      %1072 = vst.msk [vmem:[#allocation3 + $0x68] sm:$0x3] %vm1059, 0.0
      %1073 = vst.msk [vmem:[#allocation3 + $0x70] sm:$0xff] %vm1057, 0.0
      %1074 = vst.msk [vmem:[#allocation3 + $0x78] sm:$0x3] %vm1059, 0.0
      %1075 = vst.msk [vmem:[#allocation3 + $0x80] sm:$0xff] %vm1057, 0.0
      %1076 = vst.msk [vmem:[#allocation3 + $0x88] sm:$0x3] %vm1059, 0.0
      %1077 = vst.msk [vmem:[#allocation3 + $0x90] sm:$0xff] %vm1057, 0.0
      %1078 = vst.msk [vmem:[#allocation3 + $0x98] sm:$0x3] %vm1059, 0.0
      %s1079 = scalar_lea.vmem [#allocation3], 16
      %1080 = vst.msk [vmem:[%s1079 + $0x1] sm:$0xff] %vm1057, %v1049
      %1081 = vst.msk [vmem:[%s1079 + $0x11] sm:$0xff] %vm1057, %v1050
      %1082 = vst.msk [vmem:[%s1079 + $0x21] sm:$0xff] %vm1057, %v1051
      %1083 = vst.msk [vmem:[%s1079 + $0x31] sm:$0xff] %vm1057, %v1052
      %1084 = vst.msk [vmem:[%s1079 + $0x41] sm:$0xff] %vm1057, %v1053
      %1085 = vst.msk [vmem:[%s1079 + $0x51] sm:$0xff] %vm1057, %v1054
      %1086 = vst.msk [vmem:[%s1079 + $0x61] sm:$0xff] %vm1057, %v1055
      %1087 = vst.msk [vmem:[%s1079 + $0x71] sm:$0xff] %vm1057, %v1056
      %v1088 = vld [vmem:[#allocation3] sm:$0xff]
      %v1089 = vld [vmem:[#allocation3 + $0x8] sm:$0x3]
      %v1090 = vld [vmem:[#allocation3 + $0x10] sm:$0xff]
      %v1091 = vld [vmem:[#allocation3 + $0x18] sm:$0x3]
      %v1092 = vld [vmem:[#allocation3 + $0x20] sm:$0xff]
      %v1093 = vld [vmem:[#allocation3 + $0x28] sm:$0x3]
      %v1094 = vld [vmem:[#allocation3 + $0x30] sm:$0xff]
      %v1095 = vld [vmem:[#allocation3 + $0x38] sm:$0x3]
      %v1096 = vld [vmem:[#allocation3 + $0x40] sm:$0xff]
      %v1097 = vld [vmem:[#allocation3 + $0x48] sm:$0x3]
      %v1098 = vld [vmem:[#allocation3 + $0x50] sm:$0xff]
      %v1099 = vld [vmem:[#allocation3 + $0x58] sm:$0x3]
      %v1100 = vld [vmem:[#allocation3 + $0x60] sm:$0xff]
      %v1101 = vld [vmem:[#allocation3 + $0x68] sm:$0x3]
      %v1102 = vld [vmem:[#allocation3 + $0x70] sm:$0xff]
      %v1103 = vld [vmem:[#allocation3 + $0x78] sm:$0x3]
      %v1104 = vld [vmem:[#allocation3 + $0x80] sm:$0xff]
      %v1105 = vld [vmem:[#allocation3 + $0x88] sm:$0x3]
      %v1106 = vld [vmem:[#allocation3 + $0x90] sm:$0xff]
      %v1107 = vld [vmem:[#allocation3 + $0x98] sm:$0x3]
      %v1124 = vrot.slane %v1088, 1
      %v1125 = vrot.slane %v1089, 1
      %v1126 = vsel %vm552, %v1124, %v1125
      %v1127 = vrot.slane %v1090, 1
      %v1128 = vrot.slane %v1091, 1
      %v1129 = vsel %vm552, %v1127, %v1128
      %v1130 = vrot.slane %v1092, 1
      %v1131 = vrot.slane %v1093, 1
      %v1132 = vsel %vm552, %v1130, %v1131
      %v1133 = vrot.slane %v1094, 1
      %v1134 = vrot.slane %v1095, 1
      %v1135 = vsel %vm552, %v1133, %v1134
      %v1136 = vrot.slane %v1096, 1
      %v1137 = vrot.slane %v1097, 1
      %v1138 = vsel %vm552, %v1136, %v1137
      %v1139 = vrot.slane %v1098, 1
      %v1140 = vrot.slane %v1099, 1
      %v1141 = vsel %vm552, %v1139, %v1140
      %v1142 = vrot.slane %v1100, 1
      %v1143 = vrot.slane %v1101, 1
      %v1144 = vsel %vm552, %v1142, %v1143
      %v1145 = vrot.slane %v1102, 1
      %v1146 = vrot.slane %v1103, 1
      %v1147 = vsel %vm552, %v1145, %v1146
      %1148 = vrot.lane.b32.xlu0 %v1126, 32
      %v1149 = vpop.permute.xlu0 %1148
      %1150 = vrot.lane.b32.xlu0 %v1129, 32
      %v1151 = vpop.permute.xlu0 %1150
      %1152 = vrot.lane.b32.xlu0 %v1132, 32
      %v1153 = vpop.permute.xlu0 %1152
      %1154 = vrot.lane.b32.xlu0 %v1135, 32
      %v1155 = vpop.permute.xlu0 %1154
      %1156 = vrot.lane.b32.xlu0 %v1138, 32
      %v1157 = vpop.permute.xlu0 %1156
      %1158 = vrot.lane.b32.xlu0 %v1141, 32
      %v1159 = vpop.permute.xlu0 %1158
      %1160 = vrot.lane.b32.xlu0 %v1144, 32
      %v1161 = vpop.permute.xlu0 %1160
      %1162 = vrot.lane.b32.xlu0 %v1147, 32
      %v1163 = vpop.permute.xlu0 %1162
      %vm1172 = vcmask 1045504
      %v1173 = vrot.slane %v1088, 2
      %v1174 = vrot.slane %v1089, 2
      %v1175 = vsel %vm1172, %v1173, %v1174
      %v1176 = vrot.slane %v1090, 2
      %v1177 = vrot.slane %v1091, 2
      %v1178 = vsel %vm1172, %v1176, %v1177
      %v1179 = vrot.slane %v1092, 2
      %v1180 = vrot.slane %v1093, 2
      %v1181 = vsel %vm1172, %v1179, %v1180
      %v1182 = vrot.slane %v1094, 2
      %v1183 = vrot.slane %v1095, 2
      %v1184 = vsel %vm1172, %v1182, %v1183
      %v1185 = vrot.slane %v1096, 2
      %v1186 = vrot.slane %v1097, 2
      %v1187 = vsel %vm1172, %v1185, %v1186
      %v1188 = vrot.slane %v1098, 2
      %v1189 = vrot.slane %v1099, 2
      %v1190 = vsel %vm1172, %v1188, %v1189
      %v1191 = vrot.slane %v1100, 2
      %v1192 = vrot.slane %v1101, 2
      %v1193 = vsel %vm1172, %v1191, %v1192
      %v1194 = vrot.slane %v1102, 2
      %v1195 = vrot.slane %v1103, 2
      %v1196 = vsel %vm1172, %v1194, %v1195
      %1197 = vrot.lane.b32.xlu0 %v1175, 64
      %v1198 = vpop.permute.xlu0 %1197
      %1199 = vrot.lane.b32.xlu0 %v1178, 64
      %v1200 = vpop.permute.xlu0 %1199
      %1201 = vrot.lane.b32.xlu0 %v1181, 64
      %v1202 = vpop.permute.xlu0 %1201
      %1203 = vrot.lane.b32.xlu0 %v1184, 64
      %v1204 = vpop.permute.xlu0 %1203
      %1205 = vrot.lane.b32.xlu0 %v1187, 64
      %v1206 = vpop.permute.xlu0 %1205
      %1207 = vrot.lane.b32.xlu0 %v1190, 64
      %v1208 = vpop.permute.xlu0 %1207
      %1209 = vrot.lane.b32.xlu0 %v1193, 64
      %v1210 = vpop.permute.xlu0 %1209
      %1211 = vrot.lane.b32.xlu0 %v1196, 64
      %v1212 = vpop.permute.xlu0 %1211
      %1222 = vrot.lane.b32.xlu0 %v1090, 96
      %v1223 = vpop.permute.xlu0 %1222
      %1224 = vrot.lane.b32.xlu0 %v1092, 96
      %v1225 = vpop.permute.xlu0 %1224
      %1226 = vrot.lane.b32.xlu0 %v1094, 96
      %v1227 = vpop.permute.xlu0 %1226
      %1228 = vrot.lane.b32.xlu0 %v1096, 96
      %v1229 = vpop.permute.xlu0 %1228
      %1230 = vrot.lane.b32.xlu0 %v1098, 96
      %v1231 = vpop.permute.xlu0 %1230
      %1232 = vrot.lane.b32.xlu0 %v1100, 96
      %v1233 = vpop.permute.xlu0 %1232
      %1234 = vrot.lane.b32.xlu0 %v1102, 96
      %v1235 = vpop.permute.xlu0 %1234
      %1236 = vrot.lane.b32.xlu0 %v1104, 96
      %v1237 = vpop.permute.xlu0 %1236
      %v1247 = vrot.slane %v1104, 1
      %v1248 = vrot.slane %v1105, 1
      %v1249 = vsel %vm552, %v1247, %v1248
      %v1258 = vrot.slane %v1104, 2
      %v1259 = vrot.slane %v1105, 2
      %v1260 = vsel %vm1172, %v1258, %v1259
      %1261 = vrot.lane.b32.xlu0 %v1178, 32
      %v1262 = vpop.permute.xlu0 %1261
      %1263 = vrot.lane.b32.xlu0 %v1181, 32
      %v1264 = vpop.permute.xlu0 %1263
      %1265 = vrot.lane.b32.xlu0 %v1184, 32
      %v1266 = vpop.permute.xlu0 %1265
      %1267 = vrot.lane.b32.xlu0 %v1187, 32
      %v1268 = vpop.permute.xlu0 %1267
      %1269 = vrot.lane.b32.xlu0 %v1190, 32
      %v1270 = vpop.permute.xlu0 %1269
      %1271 = vrot.lane.b32.xlu0 %v1193, 32
      %v1272 = vpop.permute.xlu0 %1271
      %1273 = vrot.lane.b32.xlu0 %v1196, 32
      %v1274 = vpop.permute.xlu0 %1273
      %1275 = vrot.lane.b32.xlu0 %v1260, 32
      %v1276 = vpop.permute.xlu0 %1275
      %1286 = vrot.lane.b32.xlu0 %v1092, 64
      %v1287 = vpop.permute.xlu0 %1286
      %1288 = vrot.lane.b32.xlu0 %v1094, 64
      %v1289 = vpop.permute.xlu0 %1288
      %1290 = vrot.lane.b32.xlu0 %v1096, 64
      %v1291 = vpop.permute.xlu0 %1290
      %1292 = vrot.lane.b32.xlu0 %v1098, 64
      %v1293 = vpop.permute.xlu0 %1292
      %1294 = vrot.lane.b32.xlu0 %v1100, 64
      %v1295 = vpop.permute.xlu0 %1294
      %1296 = vrot.lane.b32.xlu0 %v1102, 64
      %v1297 = vpop.permute.xlu0 %1296
      %1298 = vrot.lane.b32.xlu0 %v1104, 64
      %v1299 = vpop.permute.xlu0 %1298
      %1300 = vrot.lane.b32.xlu0 %v1106, 64
      %v1301 = vpop.permute.xlu0 %1300
      %v1311 = vrot.slane %v1106, 1
      %v1312 = vrot.slane %v1107, 1
      %v1313 = vsel %vm552, %v1311, %v1312
      %1314 = vrot.lane.b32.xlu0 %v1132, 96
      %v1315 = vpop.permute.xlu0 %1314
      %1316 = vrot.lane.b32.xlu0 %v1135, 96
      %v1317 = vpop.permute.xlu0 %1316
      %1318 = vrot.lane.b32.xlu0 %v1138, 96
      %v1319 = vpop.permute.xlu0 %1318
      %1320 = vrot.lane.b32.xlu0 %v1141, 96
      %v1321 = vpop.permute.xlu0 %1320
      %1322 = vrot.lane.b32.xlu0 %v1144, 96
      %v1323 = vpop.permute.xlu0 %1322
      %1324 = vrot.lane.b32.xlu0 %v1147, 96
      %v1325 = vpop.permute.xlu0 %1324
      %1326 = vrot.lane.b32.xlu0 %v1249, 96
      %v1327 = vpop.permute.xlu0 %1326
      %1328 = vrot.lane.b32.xlu0 %v1313, 96
      %v1329 = vpop.permute.xlu0 %1328
      %v1338 = vrot.slane %v1106, 2
      %v1339 = vrot.slane %v1107, 2
      %v1340 = vsel %vm1172, %v1338, %v1339
      %v1341 = vsel %vm1057, %v1088, %v1149
      %v1342 = vsel %vm1057, %v1090, %v1151
      %v1343 = vsel %vm1057, %v1092, %v1153
      %v1344 = vsel %vm1057, %v1094, %v1155
      %v1345 = vsel %vm1057, %v1096, %v1157
      %v1346 = vsel %vm1057, %v1098, %v1159
      %v1347 = vsel %vm1057, %v1100, %v1161
      %v1348 = vsel %vm1057, %v1102, %v1163
      %vm1349 = vcmask 523264
      %v1350 = vsel %vm1349, %v1341, %v1198
      %v1351 = vsel %vm1349, %v1342, %v1200
      %v1352 = vsel %vm1349, %v1343, %v1202
      %v1353 = vsel %vm1349, %v1344, %v1204
      %v1354 = vsel %vm1349, %v1345, %v1206
      %v1355 = vsel %vm1349, %v1346, %v1208
      %v1356 = vsel %vm1349, %v1347, %v1210
      %v1357 = vsel %vm1349, %v1348, %v1212
      %vm1358 = vcmask 785408
      %v1359 = vsel %vm1358, %v1350, %v1223
      %v1360 = vsel %vm1358, %v1351, %v1225
      %v1361 = vsel %vm1358, %v1352, %v1227
      %v1362 = vsel %vm1358, %v1353, %v1229
      %v1363 = vsel %vm1358, %v1354, %v1231
      %v1364 = vsel %vm1358, %v1355, %v1233
      %v1365 = vsel %vm1358, %v1356, %v1235
      %v1366 = vsel %vm1358, %v1357, %v1237
      %v1367 = vsel %vm1057, %v1129, %v1262
      %v1368 = vsel %vm1057, %v1132, %v1264
      %v1369 = vsel %vm1057, %v1135, %v1266
      %v1370 = vsel %vm1057, %v1138, %v1268
      %v1371 = vsel %vm1057, %v1141, %v1270
      %v1372 = vsel %vm1057, %v1144, %v1272
      %v1373 = vsel %vm1057, %v1147, %v1274
      %v1374 = vsel %vm1057, %v1249, %v1276
      %v1375 = vsel %vm1349, %v1367, %v1287
      %v1376 = vsel %vm1349, %v1368, %v1289
      %v1377 = vsel %vm1349, %v1369, %v1291
      %v1378 = vsel %vm1349, %v1370, %v1293
      %v1379 = vsel %vm1349, %v1371, %v1295
      %v1380 = vsel %vm1349, %v1372, %v1297
      %v1381 = vsel %vm1349, %v1373, %v1299
      %v1382 = vsel %vm1349, %v1374, %v1301
      %v1383 = vsel %vm1358, %v1375, %v1315
      %v1384 = vsel %vm1358, %v1376, %v1317
      %v1385 = vsel %vm1358, %v1377, %v1319
      %v1386 = vsel %vm1358, %v1378, %v1321
      %v1387 = vsel %vm1358, %v1379, %v1323
      %v1388 = vsel %vm1358, %v1380, %v1325
      %v1389 = vsel %vm1358, %v1381, %v1327
      %v1390 = vsel %vm1358, %v1382, %v1329
      %v1391 = vld [vmem:[%s4] sm:$0xff]
      %v1392 = vld [vmem:[%s4 + $0x8] sm:$0xff]
      %v1393 = vld [vmem:[%s4 + $0x10] sm:$0xff]
      %v1394 = vld [vmem:[%s4 + $0x18] sm:$0xff]
      %v1395 = vld [vmem:[%s4 + $0x20] sm:$0xff]
      %v1396 = vld [vmem:[%s4 + $0x28] sm:$0xff]
      %v1397 = vld [vmem:[%s4 + $0x30] sm:$0xff]
      %v1398 = vld [vmem:[%s4 + $0x38] sm:$0xff]
      %v1399 = vld [vmem:[%s4 + $0x40] sm:$0xff]
      %v1400 = vld [vmem:[%s4 + $0x48] sm:$0xff]
      %v1401 = vld [vmem:[%s4 + $0x50] sm:$0xff]
      %v1402 = vld [vmem:[%s4 + $0x58] sm:$0xff]
      %v1403 = vld [vmem:[%s4 + $0x60] sm:$0xff]
      %v1404 = vld [vmem:[%s4 + $0x68] sm:$0xff]
      %v1405 = vld [vmem:[%s4 + $0x70] sm:$0xff]
      %v1406 = vld [vmem:[%s4 + $0x78] sm:$0xff]
      %v1407 = vld [vmem:[%s4 + $0x80] sm:$0xff]
      %v1408 = vld [vmem:[%s4 + $0x88] sm:$0xff]
      %v1409 = vld [vmem:[%s4 + $0x90] sm:$0xff]
      %v1410 = vld [vmem:[%s4 + $0x98] sm:$0xff]
      %v1411 = vld [vmem:[%s4 + $0xa0] sm:$0xff]
      %v1412 = vld [vmem:[%s4 + $0xa8] sm:$0xff]
      %v1413 = vld [vmem:[%s4 + $0xb0] sm:$0xff]
      %v1414 = vld [vmem:[%s4 + $0xb8] sm:$0xff]
      %v1415 = vld [vmem:[%s4 + $0xc0] sm:$0xff]
      %v1416 = vld [vmem:[%s4 + $0xc8] sm:$0xff]
      %v1417 = vld [vmem:[%s4 + $0xd0] sm:$0xff]
      %v1418 = vld [vmem:[%s4 + $0xd8] sm:$0xff]
      %v1419 = vld [vmem:[%s4 + $0xe0] sm:$0xff]
      %v1420 = vld [vmem:[%s4 + $0xe8] sm:$0xff]
      %v1421 = vld [vmem:[%s4 + $0xf0] sm:$0xff]
      %v1422 = vld [vmem:[%s4 + $0xf8] sm:$0xff]
      %v1423 = vld [vmem:[%s4 + $0x100] sm:$0xff]
      %v1424 = vld [vmem:[%s4 + $0x108] sm:$0xff]
      %v1425 = vld [vmem:[%s4 + $0x110] sm:$0xff]
      %v1426 = vld [vmem:[%s4 + $0x118] sm:$0xff]
      %v1427 = vld [vmem:[%s5] sm:$0x1]
      %v1429 = vlaneseq
      %v1430 = vshrl.u32 %v1429, 7
      %v1431 = vsub.s32 0, %v1430
      %v1432 = vrot.slane %v1427, %v1431
      %v1434 = vsel %vm1057, %v1181, 0
      %v1436 = vsel %vm1057, %v1184, 0
      %v1438 = vsel %vm1057, %v1187, 0
      %v1440 = vsel %vm1057, %v1190, 0
      %v1442 = vsel %vm1057, %v1193, 0
      %v1444 = vsel %vm1057, %v1196, 0
      %v1446 = vsel %vm1057, %v1260, 0
      %v1448 = vsel %vm1057, %v1340, 0
      %1450 = vmatprep.subr.mxu0 0.0
      %1451 = vmatpush1.msra.mxu0 %v1391
      %1452 = vmatprep.subr.mxu0 0.0
      %1453 = vmatpush1.msra.mxu0 %v1392
      %1454 = vmatprep.subr.mxu0 0.0
      %1455 = vmatpush1.msra.mxu0 %v1393
      %1456 = vmatprep.subr.mxu0 0.0
      %1457 = vmatpush1.msra.mxu0 %v1394
      %1458 = vmatprep.subr.mxu0 0.0
      %1459 = vmatpush1.msra.mxu0 %v1395
      %1460 = vmatprep.subr.mxu0 0.0
      %1461 = vmatpush1.msra.mxu0 %v1396
      %1462 = vmatprep.subr.mxu0 0.0
      %1463 = vmatpush1.msra.mxu0 %v1397
      %1464 = vmatprep.subr.mxu0 0.0
      %1465 = vmatpush1.msra.mxu0 %v1398
      %1466 = vmatprep.subr.mxu0 0.0
      %1467 = vmatpush1.msra.mxu0 %v1399
      %1468 = vmatprep.subr.mxu0 0.0
      %1469 = vmatpush1.msra.mxu0 %v1400
      %1470 = vmatprep.subr.mxu0 0.0
      %1471 = vmatpush1.msra.mxu0 %v1401
      %1472 = vmatprep.subr.mxu0 0.0
      %1473 = vmatpush1.msra.mxu0 %v1402
      %1474 = vmatprep.subr.mxu0 0.0
      %1475 = vmatpush1.msra.mxu0 %v1403
      %1476 = vmatprep.subr.mxu0 0.0
      %1477 = vmatpush1.msra.mxu0 %v1404
      %1478 = vmatprep.subr.mxu0 0.0
      %1479 = vmatpush1.msra.mxu0 %v1405
      %1480 = vmatprep.subr.mxu0 0.0
      %1481 = vmatpush1.msra.mxu0 %v1406
      %1482 = vmatprep.subr.mxu0 0.0
      %1483 = vmatpush1.msra.mxu0 %v1407
      %1484 = vmatprep.subr.mxu0 0.0
      %1485 = vmatpush1.msra.mxu0 %v1408
      %1486 = vmatprep.subr.mxu0 0.0
      %1487 = vmatpush1.msra.mxu0 %v1409
      %1488 = vmatprep.subr.mxu0 0.0
      %1489 = vmatpush1.msra.mxu0 %v1410
      %1490 = vmatprep.subr.mxu0 0.0
      %1491 = vmatpush1.msra.mxu0 %v1411
      %1492 = vmatprep.subr.mxu0 0.0
      %1493 = vmatpush1.msra.mxu0 %v1412
      %1494 = vmatprep.subr.mxu0 0.0
      %1495 = vmatpush1.msra.mxu0 %v1413
      %1496 = vmatprep.subr.mxu0 0.0
      %1497 = vmatpush1.msra.mxu0 %v1414
      %1498 = vmatprep.subr.mxu0 0.0
      %1499 = vmatpush1.msra.mxu0 %v1415
      %1500 = vmatprep.subr.mxu0 0.0
      %1501 = vmatpush1.msra.mxu0 %v1416
      %1502 = vmatprep.subr.mxu0 0.0
      %1503 = vmatpush1.msra.mxu0 %v1417
      %1504 = vmatprep.subr.mxu0 0.0
      %1505 = vmatpush1.msra.mxu0 %v1418
      %1506 = vmatprep.subr.mxu0 0.0
      %1507 = vmatpush1.msra.mxu0 %v1419
      %1508 = vmatprep.subr.mxu0 0.0
      %1509 = vmatpush1.msra.mxu0 %v1420
      %1510 = vmatprep.subr.mxu0 0.0
      %1511 = vmatpush1.msra.mxu0 %v1421
      %1512 = vmatprep.subr.mxu0 0.0
      %1513 = vmatpush1.msra.mxu0 %v1422
      %1514 = vmatprep.mubr.f32.mxu0 %v1383
      %1515 = vmatmul.mubr.f32.gmra.mrb[0].mxu0 %v1359
      %v1516 = vpop.f32.mrb[0].mxu0
      %v1517 = vadd.f32 %v1432, %v1516
      %v1518 = vpop.f32.mrb[0].mxu0
      %1519 = vmatprep.mubr.f32.mxu0 %v1384
      %1520 = vmatmul.mubr.f32.gmra.mrb[0].mxu0 %v1360
      %v1521 = vpop.f32.mrb[0].mxu0
      %v1522 = vadd.f32 %v1432, %v1521
      %v1523 = vpop.f32.mrb[0].mxu0
      %1524 = vmatprep.mubr.f32.mxu0 %v1385
      %1525 = vmatmul.mubr.f32.gmra.mrb[0].mxu0 %v1361
      %v1526 = vpop.f32.mrb[0].mxu0
      %v1527 = vadd.f32 %v1432, %v1526
      %v1528 = vpop.f32.mrb[0].mxu0
      %1529 = vmatprep.mubr.f32.mxu0 %v1386
      %1530 = vmatmul.mubr.f32.gmra.mrb[0].mxu0 %v1362
      %v1531 = vpop.f32.mrb[0].mxu0
      %v1532 = vadd.f32 %v1432, %v1531
      %v1533 = vpop.f32.mrb[0].mxu0
      %1534 = vmatprep.mubr.f32.mxu0 %v1387
      %1535 = vmatmul.mubr.f32.gmra.mrb[0].mxu0 %v1363
      %v1536 = vpop.f32.mrb[0].mxu0
      %v1537 = vadd.f32 %v1432, %v1536
      %v1538 = vpop.f32.mrb[0].mxu0
      %1539 = vmatprep.mubr.f32.mxu0 %v1388
      %1540 = vmatmul.mubr.f32.gmra.mrb[0].mxu0 %v1364
      %v1541 = vpop.f32.mrb[0].mxu0
      %v1542 = vadd.f32 %v1432, %v1541
      %v1543 = vpop.f32.mrb[0].mxu0
      %1544 = vmatprep.mubr.f32.mxu0 %v1389
      %1545 = vmatmul.mubr.f32.gmra.mrb[0].mxu0 %v1365
      %v1546 = vpop.f32.mrb[0].mxu0
      %v1547 = vadd.f32 %v1432, %v1546
      %v1548 = vpop.f32.mrb[0].mxu0
      %1549 = vmatprep.mubr.f32.mxu0 %v1390
      %1550 = vmatmul.mubr.f32.gmra.mrb[0].mxu0 %v1366
      %v1551 = vpop.f32.mrb[0].mxu0
      %v1552 = vadd.f32 %v1432, %v1551
      %v1553 = vpop.f32.mrb[0].mxu0
      %1554 = vdwg.mxu0
      %1555 = vmatprep.subr.mxu0 0.0
      %1556 = vmatpush1.msra.mxu0 %v1423
      %1557 = vmatprep.subr.mxu0 0.0
      %1558 = vmatpush1.msra.mxu0 %v1424
      %1559 = vmatprep.subr.mxu0 0.0
      %1560 = vmatpush1.msra.mxu0 %v1425
      %1561 = vmatprep.subr.mxu0 0.0
      %1562 = vmatpush1.msra.mxu0 %v1426
      %1563 = vmatprep.subr.mxu0 0.0
      %1564 = vmatpush1.msra.mxu0 0.0
      %1565 = vmatprep.subr.mxu0 0.0
      %1566 = vmatpush1.msra.mxu0 0.0
      %1567 = vmatprep.subr.mxu0 0.0
      %1568 = vmatpush1.msra.mxu0 0.0
      %1569 = vmatprep.subr.mxu0 0.0
      %1570 = vmatpush1.msra.mxu0 0.0
      %1571 = vmatprep.subr.mxu0 0.0
      %1572 = vmatpush1.msra.mxu0 0.0
      %1573 = vmatprep.subr.mxu0 0.0
      %1574 = vmatpush1.msra.mxu0 0.0
      %1575 = vmatprep.subr.mxu0 0.0
      %1576 = vmatpush1.msra.mxu0 0.0
      %1577 = vmatprep.subr.mxu0 0.0
      %1578 = vmatpush1.msra.mxu0 0.0
      %1579 = vmatprep.subr.mxu0 0.0
      %1580 = vmatpush1.msra.mxu0 0.0
      %1581 = vmatprep.subr.mxu0 0.0
      %1582 = vmatpush1.msra.mxu0 0.0
      %1583 = vmatprep.subr.mxu0 0.0
      %1584 = vmatpush1.msra.mxu0 0.0
      %1585 = vmatprep.subr.mxu0 0.0
      %1586 = vmatpush1.msra.mxu0 0.0
      %1587 = vmatprep.subr.mxu0 0.0
      %1588 = vmatpush1.msra.mxu0 0.0
      %1589 = vmatprep.subr.mxu0 0.0
      %1590 = vmatpush1.msra.mxu0 0.0
      %1591 = vmatprep.subr.mxu0 0.0
      %1592 = vmatpush1.msra.mxu0 0.0
      %1593 = vmatprep.subr.mxu0 0.0
      %1594 = vmatpush1.msra.mxu0 0.0
      %1595 = vmatprep.subr.mxu0 0.0
      %1596 = vmatpush1.msra.mxu0 0.0
      %1597 = vmatprep.subr.mxu0 0.0
      %1598 = vmatpush1.msra.mxu0 0.0
      %1599 = vmatprep.subr.mxu0 0.0
      %1600 = vmatpush1.msra.mxu0 0.0
      %1601 = vmatprep.subr.mxu0 0.0
      %1602 = vmatpush1.msra.mxu0 0.0
      %1603 = vmatprep.subr.mxu0 0.0
      %1604 = vmatpush1.msra.mxu0 0.0
      %1605 = vmatprep.subr.mxu0 0.0
      %1606 = vmatpush1.msra.mxu0 0.0
      %1607 = vmatprep.subr.mxu0 0.0
      %1608 = vmatpush1.msra.mxu0 0.0
      %1609 = vmatprep.subr.mxu0 0.0
      %1610 = vmatpush1.msra.mxu0 0.0
      %1611 = vmatprep.subr.mxu0 0.0
      %1612 = vmatpush1.msra.mxu0 0.0
      %1613 = vmatprep.subr.mxu0 0.0
      %1614 = vmatpush1.msra.mxu0 0.0
      %1615 = vmatprep.subr.mxu0 0.0
      %1616 = vmatpush1.msra.mxu0 0.0
      %1617 = vmatprep.subr.mxu0 0.0
      %1618 = vmatpush1.msra.mxu0 0.0
      %1619 = vmatprep.mubr.f32.mxu0 0.0
      %1620 = vmatmul.mubr.f32.gmra.mrb[0].mxu0 %v1434
      %v1621 = vpop.f32.mrb[0].mxu0
      %v1622 = vadd.f32 %v1517, %v1621
      %v1623 = vpop.f32.mrb[0].mxu0
      %1624 = vmatprep.mubr.f32.mxu0 0.0
      %1625 = vmatmul.mubr.f32.gmra.mrb[0].mxu0 %v1436
      %v1626 = vpop.f32.mrb[0].mxu0
      %v1627 = vadd.f32 %v1522, %v1626
      %v1628 = vpop.f32.mrb[0].mxu0
      %1629 = vmatprep.mubr.f32.mxu0 0.0
      %1630 = vmatmul.mubr.f32.gmra.mrb[0].mxu0 %v1438
      %v1631 = vpop.f32.mrb[0].mxu0
      %v1632 = vadd.f32 %v1527, %v1631
      %v1633 = vpop.f32.mrb[0].mxu0
      %1634 = vmatprep.mubr.f32.mxu0 0.0
      %1635 = vmatmul.mubr.f32.gmra.mrb[0].mxu0 %v1440
      %v1636 = vpop.f32.mrb[0].mxu0
      %v1637 = vadd.f32 %v1532, %v1636
      %v1638 = vpop.f32.mrb[0].mxu0
      %1639 = vmatprep.mubr.f32.mxu0 0.0
      %1640 = vmatmul.mubr.f32.gmra.mrb[0].mxu0 %v1442
      %v1641 = vpop.f32.mrb[0].mxu0
      %v1642 = vadd.f32 %v1537, %v1641
      %v1643 = vpop.f32.mrb[0].mxu0
      %1644 = vmatprep.mubr.f32.mxu0 0.0
      %1645 = vmatmul.mubr.f32.gmra.mrb[0].mxu0 %v1444
      %v1646 = vpop.f32.mrb[0].mxu0
      %v1647 = vadd.f32 %v1542, %v1646
      %v1648 = vpop.f32.mrb[0].mxu0
      %1649 = vmatprep.mubr.f32.mxu0 0.0
      %1650 = vmatmul.mubr.f32.gmra.mrb[0].mxu0 %v1446
      %v1651 = vpop.f32.mrb[0].mxu0
      %v1652 = vadd.f32 %v1547, %v1651
      %v1653 = vpop.f32.mrb[0].mxu0
      %1654 = vmatprep.mubr.f32.mxu0 0.0
      %1655 = vmatmul.mubr.f32.gmra.mrb[0].mxu0 %v1448
      %v1656 = vpop.f32.mrb[0].mxu0
      %v1657 = vadd.f32 %v1552, %v1656
      %v1658 = vpop.f32.mrb[0].mxu0
      %1659 = vdwg.mxu0
      %v1660 = vmax.f32 %v1622, 0.0
      %v1661 = vmax.f32 %v1627, 0.0
      %v1662 = vmax.f32 %v1632, 0.0
      %v1663 = vmax.f32 %v1637, 0.0
      %v1664 = vmax.f32 %v1642, 0.0
      %v1665 = vmax.f32 %v1647, 0.0
      %v1666 = vmax.f32 %v1652, 0.0
      %v1667 = vmax.f32 %v1657, 0.0
      %vm1668 = vcmask 64512
      %1669 = vst.msk [vmem:[%s251] sm:$0xff] %vm1668, %v1660
      %1670 = vst.msk [vmem:[%s251 + $0x8] sm:$0xff] %vm1668, %v1661
      %1671 = vst.msk [vmem:[%s251 + $0x10] sm:$0xff] %vm1668, %v1662
      %1672 = vst.msk [vmem:[%s251 + $0x18] sm:$0xff] %vm1668, %v1663
      %1673 = vst.msk [vmem:[%s251 + $0x20] sm:$0xff] %vm1668, %v1664
      %1674 = vst.msk [vmem:[%s251 + $0x28] sm:$0xff] %vm1668, %v1665
      %1675 = vst.msk [vmem:[%s251 + $0x30] sm:$0xff] %vm1668, %v1666
      %1676 = vst.msk [vmem:[%s251 + $0x38] sm:$0xff] %vm1668, %v1667
      %p1677 = scmp.lt.s32.totalorder %s17, 1
      %s1678 = scalar_select %p1677, %s17, 1
      %s1679 = smul.addr %s1678, 8
      %s1680 = smul.addr %s1679, 8
      %s1681 = scalar_lea.vmem %s6, %s1680
      // Predicated region
      $region45: #{sepconv_forward.1} parent=43 // pred_check
        %p1682 = pneg %p166
      $region46: #{sepconv_forward.1} parent=43 // pred_check_branch
        %1684 = sbr.rel (%p1682) target = $region48
      $region47: #{sepconv_forward.1} parent=43 // pred_region
        _
      $region48: #{sepconv_forward.1} parent=43 // pred_fallthru
        _
    $region44: #{sepconv_forward.1} parent=5 // pred_fallthru
      _
    %p1685 = scmp.le.s32.totalorder 2, %s12
    // Predicated region
    $region49: #{sepconv_forward.1} parent=5 // pred_check
      %p1686 = pneg %p1685
    $region50: #{sepconv_forward.1} parent=5 // pred_check_branch
      %1688 = sbr.rel (%p1686) target = $region52
    $region51: #{sepconv_forward.1} parent=5 // pred_region
      %s1689 = ssub.s32 %s12, 2
      // Predicated region
      $region53: #{sepconv_forward.1} parent=51 // pred_check
        %p1690 = pneg %p172
      $region54: #{sepconv_forward.1} parent=51 // pred_check_branch
        %1692 = sbr.rel (%p1690) target = $region56
      $region55: #{sepconv_forward.1} parent=51 // pred_region
        %p1693 = scmp.lt.s32.totalorder %s18, 1
        %s1694 = scalar_select %p1693, %s18, 1
        %s1695 = smul.addr %s1694, 8
        %s1696 = smul.addr %s1695, 8
        %s1697 = scalar_lea.vmem %s6, %s1696
      $region56: #{sepconv_forward.1} parent=51 // pred_fallthru
        _
    $region52: #{sepconv_forward.1} parent=5 // pred_fallthru
      _
  $region6: #{sepconv_forward.1} parent=0 // loop_footer
    %s16 = sadd.s32 1, %s12
  $region7: #{sepconv_forward.1} parent=0 // loop_footer_branch
    %11 = sbr.rel target = $region3
  $region8: #{sepconv_forward.1} parent=0 // loop_exit
    _

</llo_original>
